<compile_context>
chip_gen: v6e
topology: v6e:2x2x1
jax: 0.10.0
libtpu: 0.0.40
codegen_flags: <defaults>
</compile_context>

<pallas_src>
import jax
import jax.numpy as jnp
from jax.experimental import pallas as pl
from jax.experimental.pallas import tpu as pltpu


def _cnn_kernel(x_ref, w1_ref, b1_ref, w2_ref, b2_ref, w3_ref, b3_ref, out_ref):
    # Batch-on-lane layout: x is (6, TB); weights keep PyTorch (out, in) layout.
    x = x_ref[...]                                                    # (6, TB)

    # conv1 (k=1): W1 @ x + b1, ReLU -> (16, TB)
    h1 = jnp.dot(w1_ref[...], x, preferred_element_type=jnp.float32) + b1_ref[...]
    h1 = jnp.maximum(h1, 0.0)

    # conv2 (k=1): W2 @ h1 + b2, ReLU -> (8, TB)
    h2 = jnp.dot(w2_ref[...], h1, preferred_element_type=jnp.float32) + b2_ref[...]
    h2 = jnp.maximum(h2, 0.0)

    # fc1: W3 @ h2 + b3 -> (2, TB)
    y = jnp.dot(w3_ref[...], h2, preferred_element_type=jnp.float32) + b3_ref[...]

    out_ref[...] = y.astype(out_ref.dtype)


def reference_forward(x_ncl, params):
    """Pure-JAX reference replicating the PyTorch forward exactly."""
    w1, b1, w2, b2, w3, b3 = params
    x = x_ncl[:, :, 0]                                   # (B, 6)
    h1 = jnp.maximum(x @ w1.T + b1, 0.0)                 # (B, 16)
    h2 = jnp.maximum(h1 @ w2.T + b2, 0.0)                # (B, 8)
    return h2 @ w3.T + b3                                # (B, 2)


def _round_up(x, m):
    return ((x + m - 1) // m) * m


def cnn_forward_cb(x_cb, params, *, tile_b=16384):
    """Transpose-free entry point.

    x_cb: (6, B) float32 (channels-first, batch-last / batch-on-lanes).
    Returns (2, B).  Prefer this when the producer can emit batch-last layout:
    it avoids the two XLA transpose passes needed for PyTorch's (B, 6, 1)
    convention, which otherwise add ~2-3x the kernel's own HBM traffic.
    """
    w1, b1, w2, b2, w3, b3 = params
    C, B = x_cb.shape
    assert C == 6
    assert tile_b % 128 == 0, "batch tile must be lane-aligned"

    # Cap the tile so moderate batches still yield >= 2 grid steps (keeps both
    # v7x TensorCores busy); never below one lane group.
    eff_tile = max(128, min(tile_b, _round_up(pl.cdiv(B, 2), 128)))
    grid = (pl.cdiv(B, eff_tile),)   # ragged tail block is padded/masked by Pallas

    # Biases as (out, 1) columns so they broadcast across the lane (batch) axis.
    b1c = b1.reshape(-1, 1)                              # (16, 1)
    b2c = b2.reshape(-1, 1)                              # (8, 1)
    b3c = b3.reshape(-1, 1)                              # (2, 1)

    # Weights/biases: constant index_map -> VMEM-resident across all batch tiles.
    resident = lambda shp: pl.BlockSpec(shp, lambda i: (0, 0))

    out_cb = pl.pallas_call(
        _cnn_kernel,
        out_shape=jax.ShapeDtypeStruct((2, B), jnp.float32),
        grid=grid,
        in_specs=[
            pl.BlockSpec((6, eff_tile), lambda i: (0, i)),   # x: tiled along batch
            resident(w1.shape), resident(b1c.shape),
            resident(w2.shape), resident(b2c.shape),
            resident(w3.shape), resident(b3c.shape),
        ],
        out_specs=pl.BlockSpec((2, eff_tile), lambda i: (0, i)),
        compiler_params=pltpu.CompilerParams(
            dimension_semantics=("parallel",),               # shard tiles over TCs (v7x)
        ),
    )(x_cb, w1, b1c, w2, b2c, w3, b3c)
    return out_cb


def cnn_forward(x_ncl, params, *, tile_b=16384, min_pallas_batch=2048):
    """x_ncl: (B, 6, 1) float32, NCL layout (PyTorch Conv1d convention)."""
    B = x_ncl.shape[0]
    assert x_ncl.shape[1:] == (6, 1)

    # Small/moderate batches: a fused XLA dot chain beats pallas_call launch
    # cost plus the layout transposes needed to put batch on the lane axis.
    if B < min_pallas_batch:
        return reference_forward(x_ncl, params)

    # Single XLA pass to put batch on lanes.  If the upstream producer can emit
    # (6, B) directly, call cnn_forward_cb and skip this (and the final
    # transpose) entirely.
    x_cb = jnp.transpose(x_ncl[:, :, 0])                 # (6, B)
    out_cb = cnn_forward_cb(x_cb, params, tile_b=tile_b)
    return jnp.transpose(out_cb)                          # (B, 2)


def init_params(key):
    """Deterministic init mirroring the PyTorch layer shapes.
    conv1: (16, 6) weight (kernel_size=1 squeezed), (16,) bias
    conv2: (8, 16) weight, (8,) bias
    fc1:   (2, 8)  weight, (2,) bias
    """
    k1, k2, k3, k4, k5, k6 = jax.random.split(key, 6)

    def uinit(k, shape, fan_in):
        bound = 1.0 / jnp.sqrt(fan_in)
        return jax.random.uniform(k, shape, jnp.float32, -bound, bound)

    w1 = uinit(k1, (16, 6), 6.0)
    b1 = uinit(k2, (16,), 6.0)
    w2 = uinit(k3, (8, 16), 16.0)
    b2 = uinit(k4, (8,), 16.0)
    w3 = uinit(k5, (2, 8), 8.0)
    b3 = uinit(k6, (2,), 8.0)
    return (w1, b1, w2, b2, w3, b3)


if __name__ == "__main__":
    key = jax.random.PRNGKey(0)
    pkey, xkey = jax.random.split(key)

    params = init_params(pkey)

    # B=4000 exercises the Pallas path (>= min_pallas_batch), the capped tile
    # (eff_tile = 2048 -> 2 grid steps for megacore sharding) and the ragged
    # tail (second block has only 1952 valid columns, masked by Pallas).
    B = 4000
    x = jax.random.normal(xkey, (B, 6, 1), dtype=jnp.float32)

    out = jax.block_until_ready(cnn_forward(x, params))
    ref = reference_forward(x, params)
    assert out.shape == (B, 2)
    assert jnp.allclose(out, ref, atol=1e-5, rtol=1e-5)

    # Also exercise the transpose-free (6, B) entry point once.
    out_cb = jax.block_until_ready(cnn_forward_cb(jnp.transpose(x[:, :, 0]), params))
    assert jnp.allclose(jnp.transpose(out_cb), ref, atol=1e-5, rtol=1e-5)

    print("KERNEL_OK")
</pallas_src>

<mosaic_0001>
module attributes {stable_mosaic.version = 11 : i64} {
  func.func @_cnn_kernel(%arg0: i32, %arg1: memref<6x2048xf32, #tpu.memory_space<vmem>>, %arg2: memref<16x6xf32, #tpu.memory_space<vmem>>, %arg3: memref<16x1xf32, #tpu.memory_space<vmem>>, %arg4: memref<8x16xf32, #tpu.memory_space<vmem>>, %arg5: memref<8x1xf32, #tpu.memory_space<vmem>>, %arg6: memref<2x8xf32, #tpu.memory_space<vmem>>, %arg7: memref<2x1xf32, #tpu.memory_space<vmem>>, %arg8: memref<2x2048xf32, #tpu.memory_space<vmem>>) attributes {dimension_semantics = [#tpu.dimension_semantics<parallel>], iteration_bounds = array<i64: 2>, scalar_prefetch = 0 : i64, scratch_operands = 0 : i64, tpu.core_type = #tpu.core_type<tc>, window_params = [{transform_indices = @transform_0, window_bounds = array<i64: 6, 2048>}, {pipeline_mode = #tpu.pipeline_mode<synchronous>, transform_indices = @transform_1, window_bounds = array<i64: 16, 6>}, {pipeline_mode = #tpu.pipeline_mode<synchronous>, transform_indices = @transform_2, window_bounds = array<i64: 16, 1>}, {pipeline_mode = #tpu.pipeline_mode<synchronous>, transform_indices = @transform_3, window_bounds = array<i64: 8, 16>}, {pipeline_mode = #tpu.pipeline_mode<synchronous>, transform_indices = @transform_4, window_bounds = array<i64: 8, 1>}, {pipeline_mode = #tpu.pipeline_mode<synchronous>, transform_indices = @transform_5, window_bounds = array<i64: 2, 8>}, {pipeline_mode = #tpu.pipeline_mode<synchronous>, transform_indices = @transform_6, window_bounds = array<i64: 2, 1>}, {transform_indices = @transform_7, window_bounds = array<i64: 2, 2048>}]} {
    %c0 = arith.constant 0 : index
    %c0_0 = arith.constant 0 : index
    %0 = vector.load %arg1[%c0, %c0_0] : memref<6x2048xf32, #tpu.memory_space<vmem>>, vector<6x2048xf32>
    %c0_1 = arith.constant 0 : index
    %c0_2 = arith.constant 0 : index
    %1 = vector.load %arg2[%c0_1, %c0_2] : memref<16x6xf32, #tpu.memory_space<vmem>>, vector<16x6xf32>
    %cst = arith.constant dense<0.000000e+00> : vector<16x2048xf32>
    %2 = tpu.matmul %1, %0, %cst {dimension_numbers = #tpu.dot_dimension_numbers<[1], [0], [0], [1], [0, 0, 1, 1], [], []>} : vector<16x6xf32>, vector<6x2048xf32>, vector<16x2048xf32> -> vector<16x2048xf32>
    %c0_3 = arith.constant 0 : index
    %c0_4 = arith.constant 0 : index
    %3 = vector.load %arg3[%c0_3, %c0_4] : memref<16x1xf32, #tpu.memory_space<vmem>>, vector<16x1xf32>
    %4 = vector.broadcast %3 : vector<16x1xf32> to vector<16x2048xf32>
    %5 = arith.addf %2, %4 : vector<16x2048xf32>
    %cst_5 = arith.constant 0.000000e+00 : f32
    %6 = vector.broadcast %cst_5 : f32 to vector<16x2048xf32>
    %7 = arith.maximumf %5, %6 : vector<16x2048xf32>
    %c0_6 = arith.constant 0 : index
    %c0_7 = arith.constant 0 : index
    %8 = vector.load %arg4[%c0_6, %c0_7] : memref<8x16xf32, #tpu.memory_space<vmem>>, vector<8x16xf32>
    %cst_8 = arith.constant dense<0.000000e+00> : vector<8x2048xf32>
    %9 = tpu.matmul %8, %7, %cst_8 {dimension_numbers = #tpu.dot_dimension_numbers<[1], [0], [0], [1], [0, 0, 1, 1], [], []>} : vector<8x16xf32>, vector<16x2048xf32>, vector<8x2048xf32> -> vector<8x2048xf32>
    %c0_9 = arith.constant 0 : index
    %c0_10 = arith.constant 0 : index
    %10 = vector.load %arg5[%c0_9, %c0_10] : memref<8x1xf32, #tpu.memory_space<vmem>>, vector<8x1xf32>
    %11 = vector.broadcast %10 : vector<8x1xf32> to vector<8x2048xf32>
    %12 = arith.addf %9, %11 : vector<8x2048xf32>
    %cst_11 = arith.constant 0.000000e+00 : f32
    %13 = vector.broadcast %cst_11 : f32 to vector<8x2048xf32>
    %14 = arith.maximumf %12, %13 : vector<8x2048xf32>
    %c0_12 = arith.constant 0 : index
    %c0_13 = arith.constant 0 : index
    %15 = vector.load %arg6[%c0_12, %c0_13] : memref<2x8xf32, #tpu.memory_space<vmem>>, vector<2x8xf32>
    %cst_14 = arith.constant dense<0.000000e+00> : vector<2x2048xf32>
    %16 = tpu.matmul %15, %14, %cst_14 {dimension_numbers = #tpu.dot_dimension_numbers<[1], [0], [0], [1], [0, 0, 1, 1], [], []>} : vector<2x8xf32>, vector<8x2048xf32>, vector<2x2048xf32> -> vector<2x2048xf32>
    %c0_15 = arith.constant 0 : index
    %c0_16 = arith.constant 0 : index
    %17 = vector.load %arg7[%c0_15, %c0_16] : memref<2x1xf32, #tpu.memory_space<vmem>>, vector<2x1xf32>
    %18 = vector.broadcast %17 : vector<2x1xf32> to vector<2x2048xf32>
    %19 = arith.addf %16, %18 : vector<2x2048xf32>
    %c0_17 = arith.constant 0 : index
    %c0_18 = arith.constant 0 : index
    %20 = vector.load %arg8[%c0_17, %c0_18] : memref<2x2048xf32, #tpu.memory_space<vmem>>, vector<2x2048xf32>
    tpu.vector_store %arg8[%c0_17, %c0_18], %19 {strides = array<i32>} : memref<2x2048xf32, #tpu.memory_space<vmem>>, vector<2x2048xf32>,
    return
  }
  func.func @transform_0(%arg0: i32) -> (i32, i32) {
    %c0_i32 = arith.constant 0 : i32
    %c0_i32_0 = arith.constant 0 : i32
    return %c0_i32, %arg0 : i32, i32
  }
  func.func @transform_1(%arg0: i32) -> (i32, i32) {
    %c0_i32 = arith.constant 0 : i32
    %c0_i32_0 = arith.constant 0 : i32
    %c0_i32_1 = arith.constant 0 : i32
    return %c0_i32, %c0_i32_0 : i32, i32
  }
  func.func @transform_2(%arg0: i32) -> (i32, i32) {
    %c0_i32 = arith.constant 0 : i32
    %c0_i32_0 = arith.constant 0 : i32
    %c0_i32_1 = arith.constant 0 : i32
    return %c0_i32, %c0_i32_0 : i32, i32
  }
  func.func @transform_3(%arg0: i32) -> (i32, i32) {
    %c0_i32 = arith.constant 0 : i32
    %c0_i32_0 = arith.constant 0 : i32
    %c0_i32_1 = arith.constant 0 : i32
    return %c0_i32, %c0_i32_0 : i32, i32
  }
  func.func @transform_4(%arg0: i32) -> (i32, i32) {
    %c0_i32 = arith.constant 0 : i32
    %c0_i32_0 = arith.constant 0 : i32
    %c0_i32_1 = arith.constant 0 : i32
    return %c0_i32, %c0_i32_0 : i32, i32
  }
  func.func @transform_5(%arg0: i32) -> (i32, i32) {
    %c0_i32 = arith.constant 0 : i32
    %c0_i32_0 = arith.constant 0 : i32
    %c0_i32_1 = arith.constant 0 : i32
    return %c0_i32, %c0_i32_0 : i32, i32
  }
  func.func @transform_6(%arg0: i32) -> (i32, i32) {
    %c0_i32 = arith.constant 0 : i32
    %c0_i32_0 = arith.constant 0 : i32
    %c0_i32_1 = arith.constant 0 : i32
    return %c0_i32, %c0_i32_0 : i32, i32
  }
  func.func @transform_7(%arg0: i32) -> (i32, i32) {
    %c0_i32 = arith.constant 0 : i32
    %c0_i32_0 = arith.constant 0 : i32
    return %c0_i32, %arg0 : i32, i32
  }
}

</mosaic_0001>

<llo_original>
// kernel: tpu_custom_call.1
$region0: #{tpu_custom_call.1}
  #allocation0 [shape = 'u32[]', space=smem, size = 0x4, offset = 0x4, fixed_abs, tag = 'smem constant byte address 0x4 - core index']
  #allocation1 [shape = 'u32[144,128]{1,0:T(1,128)}', space=vmem, size = 0x12000, scoped, tag = 'internal scratch']
  %s0 = inlined_call_operand.hbm [shape: f32[6,4000], index: 0, kind: input, shape index: {}]
  %s1 = inlined_call_operand.vmem [shape: f32[16,6], index: 1, kind: input, shape index: {}]
  %s2 = inlined_call_operand.vmem [shape: f32[16,1], index: 2, kind: input, shape index: {}]
  %s3 = inlined_call_operand.vmem [shape: f32[8,16], index: 3, kind: input, shape index: {}]
  %s4 = inlined_call_operand.vmem [shape: f32[8,1], index: 4, kind: input, shape index: {}]
  %s5 = inlined_call_operand.vmem [shape: f32[2,8], index: 5, kind: input, shape index: {}]
  %s6 = inlined_call_operand.vmem [shape: f32[2,1], index: 6, kind: input, shape index: {}]
  %s7 = inlined_call_operand.hbm [shape: f32[2,4000], index: 7, kind: output, shape index: {}]
  %s8 = sld [smem:[#allocation0]]
  $region65: #{tpu_custom_call.1} parent=0
    _
  %s10 = ssub.s32 1, %s8
  %s11 = scalar_select 0, %s10, %s8
  $region1: #{tpu_custom_call.1} parent=0
    #allocation2 [shape = 'u8[131072]{0}', space=vmem, size = 0x20000, scoped, tag = 'input window, operand 0']
    #allocation3 [shape = 's32[2]{0}', space=sflag, size = 0x8, scoped, tag = 'scoped memory for tpu_custom_call.1']
    #allocation4 [shape = 's32[2]{0}', space=sflag, size = 0x8, scoped, tag = 'scoped memory for tpu_custom_call.1']
    #allocation5 [shape = 'u8[32768]{0}', space=vmem, size = 0x8000, scoped, tag = 'output window, operand 0']
    %12 = vsyncpa [#allocation3], 0
    %s13 = scalar_lea.sflag [#allocation3], 1
    %14 = vsyncpa %s13, 0
    %15 = vsyncpa [#allocation4], 0
    %s16 = scalar_lea.sflag [#allocation4], 1
    %17 = vsyncpa %s16, 0
    loop: start=0, step=1, limit=4
    $region2: #{tpu_custom_call.1} parent=1 // loop_pre_header
      _
    $region3: #{tpu_custom_call.1} parent=1 // loop_header
      %s19 = sphi 0, %s23
      %p20 = scmp.ge.s32.totalorder %s19, 4
      %s29 = sphi 0, %s31
      %s32 = sphi 0, %s29
      %s33 = sphi 0, %s32
      %s49 = sphi 0, %s33
      %s53 = sphi 0, %s53
      %s55 = sphi 0, %s53
      %s56 = sphi 0, %s55
      %s70 = sphi 0, %s56
      %s74 = sphi 0, %s74
      %s76 = sphi 0, %s74
      %s77 = sphi 0, %s76
      %s91 = sphi 0, %s77
      %s95 = sphi 0, %s95
      %s97 = sphi 0, %s95
      %s98 = sphi 0, %s97
      %s112 = sphi 0, %s98
      %s116 = sphi 0, %s116
      %s118 = sphi 0, %s116
      %s119 = sphi 0, %s118
      %s133 = sphi 0, %s119
      %s137 = sphi 0, %s137
      %s139 = sphi 0, %s137
      %s140 = sphi 0, %s139
      %s154 = sphi 0, %s140
      %s158 = sphi 0, %s158
      %s160 = sphi 0, %s158
      %s161 = sphi 0, %s160
      %s175 = sphi 0, %s161
      %s181 = sphi 0, %s183
      %s184 = sphi 0, %s181
      %s185 = sphi 0, %s184
      %s201 = sphi 0, %s185
    $region4: #{tpu_custom_call.1} parent=1 // loop_header_branch
      %22 = sbr.rel (%p20) target = $region8
    $region5: #{tpu_custom_call.1} parent=1 // loop_body
      %s24 = ssub.s32 %s19, 1
      %s25 = ssub.s32 %s19, 2
      %s26 = sadd.s32 %s19, 1
      %s27 = ssub.s32 %s19, %s26
      %p28 = scmp.eq.s32.totalorder %s27, 0
      %s30 = sadd.s32 %s29, 1
      %s31 = scalar_select %p28, %s29, %s30
      %p34 = pneg %p28
      %p35 = scmp.eq.s32.totalorder %s19, 1
      %p36 = por %p34, %p35
      %p37 = scmp.ne.s32.totalorder %s29, %s32
      %p38 = scmp.eq.s32.totalorder %s19, 0
      %p39 = por %p37, %p38
      %p40 = scmp.ne.s32.totalorder %s29, %s32
      %p41 = scmp.eq.s32.totalorder %s24, 1
      %p42 = por %p40, %p41
      %p43 = scmp.ne.s32.totalorder %s32, %s33
      %p44 = scmp.eq.s32.totalorder %s24, 0
      %p45 = por %p43, %p44
      %p46 = scmp.ne.s32.totalorder %s32, %s33
      %p47 = scmp.eq.s32.totalorder %s25, 1
      %p48 = por %p46, %p47
      %p50 = scmp.ne.s32.totalorder %s33, %s49
      %p51 = scmp.eq.s32.totalorder %s25, 0
      %p52 = por %p50, %p51
      %s54 = sadd.s32 %s53, 1
      %p57 = scmp.eq.s32.totalorder %s19, 1
      %p58 = scmp.ne.s32.totalorder %s53, %s55
      %p59 = scmp.eq.s32.totalorder %s19, 0
      %p60 = por %p58, %p59
      %p61 = scmp.ne.s32.totalorder %s53, %s55
      %p62 = scmp.eq.s32.totalorder %s24, 1
      %p63 = por %p61, %p62
      %p64 = scmp.ne.s32.totalorder %s55, %s56
      %p65 = scmp.eq.s32.totalorder %s24, 0
      %p66 = por %p64, %p65
      %p67 = scmp.ne.s32.totalorder %s55, %s56
      %p68 = scmp.eq.s32.totalorder %s25, 1
      %p69 = por %p67, %p68
      %p71 = scmp.ne.s32.totalorder %s56, %s70
      %p72 = scmp.eq.s32.totalorder %s25, 0
      %p73 = por %p71, %p72
      %s75 = sadd.s32 %s74, 1
      %p78 = scmp.eq.s32.totalorder %s19, 1
      %p79 = scmp.ne.s32.totalorder %s74, %s76
      %p80 = scmp.eq.s32.totalorder %s19, 0
      %p81 = por %p79, %p80
      %p82 = scmp.ne.s32.totalorder %s74, %s76
      %p83 = scmp.eq.s32.totalorder %s24, 1
      %p84 = por %p82, %p83
      %p85 = scmp.ne.s32.totalorder %s76, %s77
      %p86 = scmp.eq.s32.totalorder %s24, 0
      %p87 = por %p85, %p86
      %p88 = scmp.ne.s32.totalorder %s76, %s77
      %p89 = scmp.eq.s32.totalorder %s25, 1
      %p90 = por %p88, %p89
      %p92 = scmp.ne.s32.totalorder %s77, %s91
      %p93 = scmp.eq.s32.totalorder %s25, 0
      %p94 = por %p92, %p93
      %s96 = sadd.s32 %s95, 1
      %p99 = scmp.eq.s32.totalorder %s19, 1
      %p100 = scmp.ne.s32.totalorder %s95, %s97
      %p101 = scmp.eq.s32.totalorder %s19, 0
      %p102 = por %p100, %p101
      %p103 = scmp.ne.s32.totalorder %s95, %s97
      %p104 = scmp.eq.s32.totalorder %s24, 1
      %p105 = por %p103, %p104
      %p106 = scmp.ne.s32.totalorder %s97, %s98
      %p107 = scmp.eq.s32.totalorder %s24, 0
      %p108 = por %p106, %p107
      %p109 = scmp.ne.s32.totalorder %s97, %s98
      %p110 = scmp.eq.s32.totalorder %s25, 1
      %p111 = por %p109, %p110
      %p113 = scmp.ne.s32.totalorder %s98, %s112
      %p114 = scmp.eq.s32.totalorder %s25, 0
      %p115 = por %p113, %p114
      %s117 = sadd.s32 %s116, 1
      %p120 = scmp.eq.s32.totalorder %s19, 1
      %p121 = scmp.ne.s32.totalorder %s116, %s118
      %p122 = scmp.eq.s32.totalorder %s19, 0
      %p123 = por %p121, %p122
      %p124 = scmp.ne.s32.totalorder %s116, %s118
      %p125 = scmp.eq.s32.totalorder %s24, 1
      %p126 = por %p124, %p125
      %p127 = scmp.ne.s32.totalorder %s118, %s119
      %p128 = scmp.eq.s32.totalorder %s24, 0
      %p129 = por %p127, %p128
      %p130 = scmp.ne.s32.totalorder %s118, %s119
      %p131 = scmp.eq.s32.totalorder %s25, 1
      %p132 = por %p130, %p131
      %p134 = scmp.ne.s32.totalorder %s119, %s133
      %p135 = scmp.eq.s32.totalorder %s25, 0
      %p136 = por %p134, %p135
      %s138 = sadd.s32 %s137, 1
      %p141 = scmp.eq.s32.totalorder %s19, 1
      %p142 = scmp.ne.s32.totalorder %s137, %s139
      %p143 = scmp.eq.s32.totalorder %s19, 0
      %p144 = por %p142, %p143
      %p145 = scmp.ne.s32.totalorder %s137, %s139
      %p146 = scmp.eq.s32.totalorder %s24, 1
      %p147 = por %p145, %p146
      %p148 = scmp.ne.s32.totalorder %s139, %s140
      %p149 = scmp.eq.s32.totalorder %s24, 0
      %p150 = por %p148, %p149
      %p151 = scmp.ne.s32.totalorder %s139, %s140
      %p152 = scmp.eq.s32.totalorder %s25, 1
      %p153 = por %p151, %p152
      %p155 = scmp.ne.s32.totalorder %s140, %s154
      %p156 = scmp.eq.s32.totalorder %s25, 0
      %p157 = por %p155, %p156
      %s159 = sadd.s32 %s158, 1
      %p162 = scmp.eq.s32.totalorder %s19, 1
      %p163 = scmp.ne.s32.totalorder %s158, %s160
      %p164 = scmp.eq.s32.totalorder %s19, 0
      %p165 = por %p163, %p164
      %p166 = scmp.ne.s32.totalorder %s158, %s160
      %p167 = scmp.eq.s32.totalorder %s24, 1
      %p168 = por %p166, %p167
      %p169 = scmp.ne.s32.totalorder %s160, %s161
      %p170 = scmp.eq.s32.totalorder %s24, 0
      %p171 = por %p169, %p170
      %p172 = scmp.ne.s32.totalorder %s160, %s161
      %p173 = scmp.eq.s32.totalorder %s25, 1
      %p174 = por %p172, %p173
      %p176 = scmp.ne.s32.totalorder %s161, %s175
      %p177 = scmp.eq.s32.totalorder %s25, 0
      %p178 = por %p176, %p177
      %s179 = ssub.s32 %s19, %s26
      %p180 = scmp.eq.s32.totalorder %s179, 0
      %s182 = sadd.s32 %s181, 1
      %s183 = scalar_select %p180, %s181, %s182
      %p186 = pneg %p180
      %p187 = scmp.eq.s32.totalorder %s19, 1
      %p188 = por %p186, %p187
      %p189 = scmp.ne.s32.totalorder %s181, %s184
      %p190 = scmp.eq.s32.totalorder %s19, 0
      %p191 = por %p189, %p190
      %p192 = scmp.ne.s32.totalorder %s181, %s184
      %p193 = scmp.eq.s32.totalorder %s24, 1
      %p194 = por %p192, %p193
      %p195 = scmp.ne.s32.totalorder %s184, %s185
      %p196 = scmp.eq.s32.totalorder %s24, 0
      %p197 = por %p195, %p196
      %p198 = scmp.ne.s32.totalorder %s184, %s185
      %p199 = scmp.eq.s32.totalorder %s25, 1
      %p200 = por %p198, %p199
      %p202 = scmp.ne.s32.totalorder %s185, %s201
      %p203 = scmp.eq.s32.totalorder %s25, 0
      %p204 = por %p202, %p203
      %p205 = scmp.le.s32.totalorder 1, %s19
      %p206 = scmp.lt.s32.totalorder %s19, 3
      %p207 = pnand %p205, %p206
      %p208 = pneg %p207
      // Predicated region
      $region9: #{tpu_custom_call.1} parent=5 // pred_check
        _
      $region10: #{tpu_custom_call.1} parent=5 // pred_check_branch
        %210 = sbr.rel (%p207) target = $region12
      $region11: #{tpu_custom_call.1} parent=5 // pred_region
        %s211 = ssub.s32 %s19, 1
        // Predicated region
        $region13: #{tpu_custom_call.1} parent=11 // pred_check
          %p212 = pneg %p66
        $region14: #{tpu_custom_call.1} parent=11 // pred_check_branch
          %214 = sbr.rel (%p212) target = $region16
        $region15: #{tpu_custom_call.1} parent=11 // pred_region
          _
        $region16: #{tpu_custom_call.1} parent=11 // pred_fallthru
          _
        // Predicated region
        $region17: #{tpu_custom_call.1} parent=11 // pred_check
          %p215 = pneg %p87
        $region18: #{tpu_custom_call.1} parent=11 // pred_check_branch
          %217 = sbr.rel (%p215) target = $region20
        $region19: #{tpu_custom_call.1} parent=11 // pred_region
          _
        $region20: #{tpu_custom_call.1} parent=11 // pred_fallthru
          _
        // Predicated region
        $region21: #{tpu_custom_call.1} parent=11 // pred_check
          %p218 = pneg %p108
        $region22: #{tpu_custom_call.1} parent=11 // pred_check_branch
          %220 = sbr.rel (%p218) target = $region24
        $region23: #{tpu_custom_call.1} parent=11 // pred_region
          _
        $region24: #{tpu_custom_call.1} parent=11 // pred_fallthru
          _
        // Predicated region
        $region25: #{tpu_custom_call.1} parent=11 // pred_check
          %p221 = pneg %p129
        $region26: #{tpu_custom_call.1} parent=11 // pred_check_branch
          %223 = sbr.rel (%p221) target = $region28
        $region27: #{tpu_custom_call.1} parent=11 // pred_region
          _
        $region28: #{tpu_custom_call.1} parent=11 // pred_fallthru
          _
        // Predicated region
        $region29: #{tpu_custom_call.1} parent=11 // pred_check
          %p224 = pneg %p150
        $region30: #{tpu_custom_call.1} parent=11 // pred_check_branch
          %226 = sbr.rel (%p224) target = $region32
        $region31: #{tpu_custom_call.1} parent=11 // pred_region
          _
        $region32: #{tpu_custom_call.1} parent=11 // pred_fallthru
          _
        // Predicated region
        $region33: #{tpu_custom_call.1} parent=11 // pred_check
          %p227 = pneg %p171
        $region34: #{tpu_custom_call.1} parent=11 // pred_check_branch
          %229 = sbr.rel (%p227) target = $region36
        $region35: #{tpu_custom_call.1} parent=11 // pred_region
          _
        $region36: #{tpu_custom_call.1} parent=11 // pred_fallthru
          _
      $region12: #{tpu_custom_call.1} parent=5 // pred_fallthru
        _
      %p230 = scmp.lt.s32.totalorder %s19, 2
      // Predicated region
      $region37: #{tpu_custom_call.1} parent=5 // pred_check
        %p231 = pneg %p230
      $region38: #{tpu_custom_call.1} parent=5 // pred_check_branch
        %233 = sbr.rel (%p231) target = $region40
      $region39: #{tpu_custom_call.1} parent=5 // pred_region
        // Predicated region
        $region41: #{tpu_custom_call.1} parent=39 // pred_check
          %p234 = pneg %p39
        $region42: #{tpu_custom_call.1} parent=39 // pred_check_branch
          %236 = sbr.rel (%p234) target = $region44
        $region43: #{tpu_custom_call.1} parent=39 // pred_region
          %s237 = sand.u32 %s29, 1
          %s238 = scalar_lea.sflag [#allocation3], %s237
          %s239 = sand.u32 %s29, 1
          %s240 = smul.addr %s239, 128
          %s241 = scalar_lea.vmem [#allocation2], %s240
          %s242 = smul.u32 16, %s19
          %s244 = ssub.s32 2048, 2048
          %245 = vsyncadd %s238, %s244
          %s246 = smul.addr %s242, 128
          %s247 = scalar_lea.hbm %s0, %s246
          %s249 = sshll.u32 %s241, 4
          %s250 = int_to_ptr.vmem [resolvable:$true] %s249
          %252 = dma.hbm_to_vmem [thread:$0]  %s247, 2048, %s250, %s238
        $region44: #{tpu_custom_call.1} parent=39 // pred_fallthru
          _
      $region40: #{tpu_custom_call.1} parent=5 // pred_fallthru
        _
      %p253 = scmp.le.s32.totalorder 1, %s19
      %p254 = scmp.lt.s32.totalorder %s19, 3
      %p255 = pnand %p253, %p254
      %p256 = pneg %p255
      // Predicated region
      $region45: #{tpu_custom_call.1} parent=5 // pred_check
        _
      $region46: #{tpu_custom_call.1} parent=5 // pred_check_branch
        %258 = sbr.rel (%p255) target = $region48
      $region47: #{tpu_custom_call.1} parent=5 // pred_region
        %s259 = ssub.s32 %s19, 1
        %s260 = sand.u32 %s32, 1
        %s261 = scalar_lea.sflag [#allocation3], %s260
        %s262 = sand.u32 %s32, 1
        %s263 = smul.addr %s262, 128
        %s264 = scalar_lea.vmem [#allocation2], %s263
        // Predicated region
        $region49: #{tpu_custom_call.1} parent=47 // pred_check
          %p265 = pneg %p45
        $region50: #{tpu_custom_call.1} parent=47 // pred_check_branch
          %267 = sbr.rel (%p265) target = $region52
        $region51: #{tpu_custom_call.1} parent=47 // pred_region
          %268 = dma.done %s261, 2048
        $region52: #{tpu_custom_call.1} parent=47 // pred_fallthru
          _
        %s269 = sand.u32 %s32, 1
        %s270 = scalar_lea.sflag [#allocation3], %s269
        %s271 = sand.u32 %s32, 1
        %s272 = smul.addr %s271, 128
        %s273 = scalar_lea.vmem [#allocation2], %s272
        %p274 = pneg %p45
        %p275 = pneg %p42
        %p276 = pneg %p66
        %p277 = pneg %p63
        %p278 = pneg %p87
        %p279 = pneg %p84
        %p280 = pneg %p108
        %p281 = pneg %p105
        %p282 = pneg %p129
        %p283 = pneg %p126
        %p284 = pneg %p150
        %p285 = pneg %p147
        %p286 = pneg %p171
        %p287 = pneg %p168
        %p288 = pneg %p197
        %p289 = pneg %p194
        %s290 = sand.u32 %s184, 1
        %s291 = scalar_lea.sflag [#allocation4], %s290
        %s292 = sand.u32 %s184, 1
        %s293 = smul.addr %s292, 32
        %s294 = scalar_lea.vmem [#allocation5], %s293
        %s295 = smul.u32 16, %s24
        %s296 = smul.u32 16, %s24
        %v297 = vld [vmem:[%s264] sm:$0x3f]
        %v298 = vld [vmem:[%s264 + $0x8] sm:$0x3f]
        %v299 = vld [vmem:[%s264 + $0x10] sm:$0x3f]
        %v300 = vld [vmem:[%s264 + $0x18] sm:$0x3f]
        %v301 = vld [vmem:[%s264 + $0x20] sm:$0x3f]
        %v302 = vld [vmem:[%s264 + $0x28] sm:$0x3f]
        %v303 = vld [vmem:[%s264 + $0x30] sm:$0x3f]
        %v304 = vld [vmem:[%s264 + $0x38] sm:$0x3f]
        %v305 = vld [vmem:[%s264 + $0x40] sm:$0x3f]
        %v306 = vld [vmem:[%s264 + $0x48] sm:$0x3f]
        %v307 = vld [vmem:[%s264 + $0x50] sm:$0x3f]
        %v308 = vld [vmem:[%s264 + $0x58] sm:$0x3f]
        %v309 = vld [vmem:[%s264 + $0x60] sm:$0x3f]
        %v310 = vld [vmem:[%s264 + $0x68] sm:$0x3f]
        %v311 = vld [vmem:[%s264 + $0x70] sm:$0x3f]
        %v312 = vld [vmem:[%s264 + $0x78] sm:$0x3f]
        %v313 = vld [vmem:[%s1] sm:$0xff]
        %v314 = vld [vmem:[%s1 + $0x8] sm:$0xff]
        %v315 = vld [vmem:[%s2] sm:$0xff]
        %v316 = vld [vmem:[%s2 + $0x8] sm:$0xff]
        %318 = vset.pattern.permute.xlu0 0
        %319 = vperm.xlu0 %318, %v315
        %v320 = vpop.permute.xlu0 %319
        %323 = vset.pattern.permute.xlu0 0
        %324 = vperm.xlu0 %323, %v316
        %v325 = vpop.permute.xlu0 %324
        %vm327 = vcmask 48128
        %v329 = vsel %vm327, %v313, 0
        %v332 = vsel %vm327, %v314, 0
        %vm334 = vcmask 1045504
        %v336 = vsel %vm334, %v297, 0
        %v339 = vsel %vm334, %v298, 0
        %v342 = vsel %vm334, %v299, 0
        %v345 = vsel %vm334, %v300, 0
        %v348 = vsel %vm334, %v301, 0
        %v351 = vsel %vm334, %v302, 0
        %v354 = vsel %vm334, %v303, 0
        %v357 = vsel %vm334, %v304, 0
        %v360 = vsel %vm334, %v305, 0
        %v363 = vsel %vm334, %v306, 0
        %v366 = vsel %vm334, %v307, 0
        %v369 = vsel %vm334, %v308, 0
        %v372 = vsel %vm334, %v309, 0
        %v375 = vsel %vm334, %v310, 0
        %v378 = vsel %vm334, %v311, 0
        %v381 = vsel %vm334, %v312, 0
        %383 = vmatprep.subr.mxu0 0.0
        %384 = vmatpush1.msra.mxu0 0.0
        %385 = vmatprep.subr.mxu0 0.0
        %386 = vmatpush1.msra.mxu0 0.0
        %387 = vmatprep.subr.mxu0 0.0
        %388 = vmatpush1.msra.mxu0 0.0
        %389 = vmatprep.subr.mxu0 0.0
        %390 = vmatpush1.msra.mxu0 0.0
        %391 = vmatprep.subr.mxu0 0.0
        %392 = vmatpush1.msra.mxu0 0.0
        %393 = vmatprep.subr.mxu0 0.0
        %394 = vmatpush1.msra.mxu0 0.0
        %395 = vmatprep.subr.mxu0 0.0
        %396 = vmatpush1.msra.mxu0 0.0
        %397 = vmatprep.subr.mxu0 0.0
        %398 = vmatpush1.msra.mxu0 0.0
        %399 = vmatprep.subr.mxu0 0.0
        %400 = vmatpush1.msra.mxu0 0.0
        %401 = vmatprep.subr.mxu0 0.0
        %402 = vmatpush1.msra.mxu0 0.0
        %403 = vmatprep.subr.mxu0 0.0
        %404 = vmatpush1.msra.mxu0 0.0
        %405 = vmatprep.subr.mxu0 0.0
        %406 = vmatpush1.msra.mxu0 0.0
        %407 = vmatprep.subr.mxu0 0.0
        %408 = vmatpush1.msra.mxu0 0.0
        %409 = vmatprep.subr.mxu0 0.0
        %410 = vmatpush1.msra.mxu0 0.0
        %411 = vmatprep.subr.mxu0 0.0
        %412 = vmatpush1.msra.mxu0 0.0
        %413 = vmatprep.subr.mxu0 %v339
        %414 = vmatpush1.msra.mxu0 %v336
        %415 = vmatprep.subr.mxu0 0.0
        %416 = vmatpush2.msra.mxu0 0.0
        %417 = vmatprep.subr.mxu0 0.0
        %418 = vmatpush2.msra.mxu0 0.0
        %419 = vmatprep.subr.mxu0 0.0
        %420 = vmatpush2.msra.mxu0 0.0
        %421 = vmatprep.subr.mxu0 0.0
        %422 = vmatpush2.msra.mxu0 0.0
        %423 = vmatprep.subr.mxu0 0.0
        %424 = vmatpush2.msra.mxu0 0.0
        %425 = vmatprep.subr.mxu0 0.0
        %426 = vmatpush2.msra.mxu0 0.0
        %427 = vmatprep.subr.mxu0 0.0
        %428 = vmatpush2.msra.mxu0 0.0
        %429 = vmatprep.subr.mxu0 0.0
        %430 = vmatpush2.msra.mxu0 0.0
        %431 = vmatprep.subr.mxu0 0.0
        %432 = vmatpush2.msra.mxu0 0.0
        %433 = vmatprep.subr.mxu0 0.0
        %434 = vmatpush2.msra.mxu0 0.0
        %435 = vmatprep.subr.mxu0 0.0
        %436 = vmatpush2.msra.mxu0 0.0
        %437 = vmatprep.subr.mxu0 0.0
        %438 = vmatpush2.msra.mxu0 0.0
        %439 = vmatprep.subr.mxu0 0.0
        %440 = vmatpush2.msra.mxu0 0.0
        %441 = vmatprep.subr.mxu0 0.0
        %442 = vmatpush2.msra.mxu0 0.0
        %443 = vmatprep.subr.mxu0 0.0
        %444 = vmatpush2.msra.mxu0 0.0
        %445 = vmatprep.subr.mxu0 0.0
        %446 = vmatpush2.msra.mxu0 0.0
        %447 = vmatprep.mubr.f32.mxu0 0.0
        %448 = vmatmul.mubr.f32.gmra.mxu0 %v329
        %v449 = vpop.f32.mrf.mxu0
        %v450 = vadd.f32 %v320, %v449
        %v451 = vpop.f32.mrf.mxu0
        %v452 = vadd.f32 %v320, %v451
        %453 = vmatprep.mubr.f32.mxu0 0.0
        %454 = vmatmul.mubr.f32.gmra.mxu0 %v332
        %v455 = vpop.f32.mrf.mxu0
        %v456 = vadd.f32 %v325, %v455
        %v457 = vpop.f32.mrf.mxu0
        %v458 = vadd.f32 %v325, %v457
        %459 = vdwg.mxu0
        %460 = vmatprep.subr.mxu0 0.0
        %461 = vmatpush1.msra.mxu0 0.0
        %462 = vmatprep.subr.mxu0 0.0
        %463 = vmatpush1.msra.mxu0 0.0
        %464 = vmatprep.subr.mxu0 0.0
        %465 = vmatpush1.msra.mxu0 0.0
        %466 = vmatprep.subr.mxu0 0.0
        %467 = vmatpush1.msra.mxu0 0.0
        %468 = vmatprep.subr.mxu0 0.0
        %469 = vmatpush1.msra.mxu0 0.0
        %470 = vmatprep.subr.mxu0 0.0
        %471 = vmatpush1.msra.mxu0 0.0
        %472 = vmatprep.subr.mxu0 0.0
        %473 = vmatpush1.msra.mxu0 0.0
        %474 = vmatprep.subr.mxu0 0.0
        %475 = vmatpush1.msra.mxu0 0.0
        %476 = vmatprep.subr.mxu0 0.0
        %477 = vmatpush1.msra.mxu0 0.0
        %478 = vmatprep.subr.mxu0 0.0
        %479 = vmatpush1.msra.mxu0 0.0
        %480 = vmatprep.subr.mxu0 0.0
        %481 = vmatpush1.msra.mxu0 0.0
        %482 = vmatprep.subr.mxu0 0.0
        %483 = vmatpush1.msra.mxu0 0.0
        %484 = vmatprep.subr.mxu0 0.0
        %485 = vmatpush1.msra.mxu0 0.0
        %486 = vmatprep.subr.mxu0 0.0
        %487 = vmatpush1.msra.mxu0 0.0
        %488 = vmatprep.subr.mxu0 0.0
        %489 = vmatpush1.msra.mxu0 0.0
        %490 = vmatprep.subr.mxu0 %v345
        %491 = vmatpush1.msra.mxu0 %v342
        %492 = vmatprep.subr.mxu0 0.0
        %493 = vmatpush2.msra.mxu0 0.0
        %494 = vmatprep.subr.mxu0 0.0
        %495 = vmatpush2.msra.mxu0 0.0
        %496 = vmatprep.subr.mxu0 0.0
        %497 = vmatpush2.msra.mxu0 0.0
        %498 = vmatprep.subr.mxu0 0.0
        %499 = vmatpush2.msra.mxu0 0.0
        %500 = vmatprep.subr.mxu0 0.0
        %501 = vmatpush2.msra.mxu0 0.0
        %502 = vmatprep.subr.mxu0 0.0
        %503 = vmatpush2.msra.mxu0 0.0
        %504 = vmatprep.subr.mxu0 0.0
        %505 = vmatpush2.msra.mxu0 0.0
        %506 = vmatprep.subr.mxu0 0.0
        %507 = vmatpush2.msra.mxu0 0.0
        %508 = vmatprep.subr.mxu0 0.0
        %509 = vmatpush2.msra.mxu0 0.0
        %510 = vmatprep.subr.mxu0 0.0
        %511 = vmatpush2.msra.mxu0 0.0
        %512 = vmatprep.subr.mxu0 0.0
        %513 = vmatpush2.msra.mxu0 0.0
        %514 = vmatprep.subr.mxu0 0.0
        %515 = vmatpush2.msra.mxu0 0.0
        %516 = vmatprep.subr.mxu0 0.0
        %517 = vmatpush2.msra.mxu0 0.0
        %518 = vmatprep.subr.mxu0 0.0
        %519 = vmatpush2.msra.mxu0 0.0
        %520 = vmatprep.subr.mxu0 0.0
        %521 = vmatpush2.msra.mxu0 0.0
        %522 = vmatprep.subr.mxu0 0.0
        %523 = vmatpush2.msra.mxu0 0.0
        %524 = vmatprep.mubr.f32.mxu0 0.0
        %525 = vmatmul.mubr.f32.gmra.mxu0 %v329
        %v526 = vpop.f32.mrf.mxu0
        %v527 = vadd.f32 %v320, %v526
        %v528 = vpop.f32.mrf.mxu0
        %v529 = vadd.f32 %v320, %v528
        %530 = vmatprep.mubr.f32.mxu0 0.0
        %531 = vmatmul.mubr.f32.gmra.mxu0 %v332
        %v532 = vpop.f32.mrf.mxu0
        %v533 = vadd.f32 %v325, %v532
        %v534 = vpop.f32.mrf.mxu0
        %v535 = vadd.f32 %v325, %v534
        %536 = vdwg.mxu0
        %537 = vmatprep.subr.mxu0 0.0
        %538 = vmatpush1.msra.mxu0 0.0
        %539 = vmatprep.subr.mxu0 0.0
        %540 = vmatpush1.msra.mxu0 0.0
        %541 = vmatprep.subr.mxu0 0.0
        %542 = vmatpush1.msra.mxu0 0.0
        %543 = vmatprep.subr.mxu0 0.0
        %544 = vmatpush1.msra.mxu0 0.0
        %545 = vmatprep.subr.mxu0 0.0
        %546 = vmatpush1.msra.mxu0 0.0
        %547 = vmatprep.subr.mxu0 0.0
        %548 = vmatpush1.msra.mxu0 0.0
        %549 = vmatprep.subr.mxu0 0.0
        %550 = vmatpush1.msra.mxu0 0.0
        %551 = vmatprep.subr.mxu0 0.0
        %552 = vmatpush1.msra.mxu0 0.0
        %553 = vmatprep.subr.mxu0 0.0
        %554 = vmatpush1.msra.mxu0 0.0
        %555 = vmatprep.subr.mxu0 0.0
        %556 = vmatpush1.msra.mxu0 0.0
        %557 = vmatprep.subr.mxu0 0.0
        %558 = vmatpush1.msra.mxu0 0.0
        %559 = vmatprep.subr.mxu0 0.0
        %560 = vmatpush1.msra.mxu0 0.0
        %561 = vmatprep.subr.mxu0 0.0
        %562 = vmatpush1.msra.mxu0 0.0
        %563 = vmatprep.subr.mxu0 0.0
        %564 = vmatpush1.msra.mxu0 0.0
        %565 = vmatprep.subr.mxu0 0.0
        %566 = vmatpush1.msra.mxu0 0.0
        %567 = vmatprep.subr.mxu0 %v351
        %568 = vmatpush1.msra.mxu0 %v348
        %569 = vmatprep.subr.mxu0 0.0
        %570 = vmatpush2.msra.mxu0 0.0
        %571 = vmatprep.subr.mxu0 0.0
        %572 = vmatpush2.msra.mxu0 0.0
        %573 = vmatprep.subr.mxu0 0.0
        %574 = vmatpush2.msra.mxu0 0.0
        %575 = vmatprep.subr.mxu0 0.0
        %576 = vmatpush2.msra.mxu0 0.0
        %577 = vmatprep.subr.mxu0 0.0
        %578 = vmatpush2.msra.mxu0 0.0
        %579 = vmatprep.subr.mxu0 0.0
        %580 = vmatpush2.msra.mxu0 0.0
        %581 = vmatprep.subr.mxu0 0.0
        %582 = vmatpush2.msra.mxu0 0.0
        %583 = vmatprep.subr.mxu0 0.0
        %584 = vmatpush2.msra.mxu0 0.0
        %585 = vmatprep.subr.mxu0 0.0
        %586 = vmatpush2.msra.mxu0 0.0
        %587 = vmatprep.subr.mxu0 0.0
        %588 = vmatpush2.msra.mxu0 0.0
        %589 = vmatprep.subr.mxu0 0.0
        %590 = vmatpush2.msra.mxu0 0.0
        %591 = vmatprep.subr.mxu0 0.0
        %592 = vmatpush2.msra.mxu0 0.0
        %593 = vmatprep.subr.mxu0 0.0
        %594 = vmatpush2.msra.mxu0 0.0
        %595 = vmatprep.subr.mxu0 0.0
        %596 = vmatpush2.msra.mxu0 0.0
        %597 = vmatprep.subr.mxu0 0.0
        %598 = vmatpush2.msra.mxu0 0.0
        %599 = vmatprep.subr.mxu0 0.0
        %600 = vmatpush2.msra.mxu0 0.0
        %601 = vmatprep.mubr.f32.mxu0 0.0
        %602 = vmatmul.mubr.f32.gmra.mxu0 %v329
        %v603 = vpop.f32.mrf.mxu0
        %v604 = vadd.f32 %v320, %v603
        %v605 = vpop.f32.mrf.mxu0
        %v606 = vadd.f32 %v320, %v605
        %607 = vmatprep.mubr.f32.mxu0 0.0
        %608 = vmatmul.mubr.f32.gmra.mxu0 %v332
        %v609 = vpop.f32.mrf.mxu0
        %v610 = vadd.f32 %v325, %v609
        %v611 = vpop.f32.mrf.mxu0
        %v612 = vadd.f32 %v325, %v611
        %613 = vdwg.mxu0
        %614 = vmatprep.subr.mxu0 0.0
        %615 = vmatpush1.msra.mxu0 0.0
        %616 = vmatprep.subr.mxu0 0.0
        %617 = vmatpush1.msra.mxu0 0.0
        %618 = vmatprep.subr.mxu0 0.0
        %619 = vmatpush1.msra.mxu0 0.0
        %620 = vmatprep.subr.mxu0 0.0
        %621 = vmatpush1.msra.mxu0 0.0
        %622 = vmatprep.subr.mxu0 0.0
        %623 = vmatpush1.msra.mxu0 0.0
        %624 = vmatprep.subr.mxu0 0.0
        %625 = vmatpush1.msra.mxu0 0.0
        %626 = vmatprep.subr.mxu0 0.0
        %627 = vmatpush1.msra.mxu0 0.0
        %628 = vmatprep.subr.mxu0 0.0
        %629 = vmatpush1.msra.mxu0 0.0
        %630 = vmatprep.subr.mxu0 0.0
        %631 = vmatpush1.msra.mxu0 0.0
        %632 = vmatprep.subr.mxu0 0.0
        %633 = vmatpush1.msra.mxu0 0.0
        %634 = vmatprep.subr.mxu0 0.0
        %635 = vmatpush1.msra.mxu0 0.0
        %636 = vmatprep.subr.mxu0 0.0
        %637 = vmatpush1.msra.mxu0 0.0
        %638 = vmatprep.subr.mxu0 0.0
        %639 = vmatpush1.msra.mxu0 0.0
        %640 = vmatprep.subr.mxu0 0.0
        %641 = vmatpush1.msra.mxu0 0.0
        %642 = vmatprep.subr.mxu0 0.0
        %643 = vmatpush1.msra.mxu0 0.0
        %644 = vmatprep.subr.mxu0 %v357
        %645 = vmatpush1.msra.mxu0 %v354
        %646 = vmatprep.subr.mxu0 0.0
        %647 = vmatpush2.msra.mxu0 0.0
        %648 = vmatprep.subr.mxu0 0.0
        %649 = vmatpush2.msra.mxu0 0.0
        %650 = vmatprep.subr.mxu0 0.0
        %651 = vmatpush2.msra.mxu0 0.0
        %652 = vmatprep.subr.mxu0 0.0
        %653 = vmatpush2.msra.mxu0 0.0
        %654 = vmatprep.subr.mxu0 0.0
        %655 = vmatpush2.msra.mxu0 0.0
        %656 = vmatprep.subr.mxu0 0.0
        %657 = vmatpush2.msra.mxu0 0.0
        %658 = vmatprep.subr.mxu0 0.0
        %659 = vmatpush2.msra.mxu0 0.0
        %660 = vmatprep.subr.mxu0 0.0
        %661 = vmatpush2.msra.mxu0 0.0
        %662 = vmatprep.subr.mxu0 0.0
        %663 = vmatpush2.msra.mxu0 0.0
        %664 = vmatprep.subr.mxu0 0.0
        %665 = vmatpush2.msra.mxu0 0.0
        %666 = vmatprep.subr.mxu0 0.0
        %667 = vmatpush2.msra.mxu0 0.0
        %668 = vmatprep.subr.mxu0 0.0
        %669 = vmatpush2.msra.mxu0 0.0
        %670 = vmatprep.subr.mxu0 0.0
        %671 = vmatpush2.msra.mxu0 0.0
        %672 = vmatprep.subr.mxu0 0.0
        %673 = vmatpush2.msra.mxu0 0.0
        %674 = vmatprep.subr.mxu0 0.0
        %675 = vmatpush2.msra.mxu0 0.0
        %676 = vmatprep.subr.mxu0 0.0
        %677 = vmatpush2.msra.mxu0 0.0
        %678 = vmatprep.mubr.f32.mxu0 0.0
        %679 = vmatmul.mubr.f32.gmra.mxu0 %v329
        %v680 = vpop.f32.mrf.mxu0
        %v681 = vadd.f32 %v320, %v680
        %v682 = vpop.f32.mrf.mxu0
        %v683 = vadd.f32 %v320, %v682
        %684 = vmatprep.mubr.f32.mxu0 0.0
        %685 = vmatmul.mubr.f32.gmra.mxu0 %v332
        %v686 = vpop.f32.mrf.mxu0
        %v687 = vadd.f32 %v325, %v686
        %v688 = vpop.f32.mrf.mxu0
        %v689 = vadd.f32 %v325, %v688
        %690 = vdwg.mxu0
        %691 = vmatprep.subr.mxu0 0.0
        %692 = vmatpush1.msra.mxu0 0.0
        %693 = vmatprep.subr.mxu0 0.0
        %694 = vmatpush1.msra.mxu0 0.0
        %695 = vmatprep.subr.mxu0 0.0
        %696 = vmatpush1.msra.mxu0 0.0
        %697 = vmatprep.subr.mxu0 0.0
        %698 = vmatpush1.msra.mxu0 0.0
        %699 = vmatprep.subr.mxu0 0.0
        %700 = vmatpush1.msra.mxu0 0.0
        %701 = vmatprep.subr.mxu0 0.0
        %702 = vmatpush1.msra.mxu0 0.0
        %703 = vmatprep.subr.mxu0 0.0
        %704 = vmatpush1.msra.mxu0 0.0
        %705 = vmatprep.subr.mxu0 0.0
        %706 = vmatpush1.msra.mxu0 0.0
        %707 = vmatprep.subr.mxu0 0.0
        %708 = vmatpush1.msra.mxu0 0.0
        %709 = vmatprep.subr.mxu0 0.0
        %710 = vmatpush1.msra.mxu0 0.0
        %711 = vmatprep.subr.mxu0 0.0
        %712 = vmatpush1.msra.mxu0 0.0
        %713 = vmatprep.subr.mxu0 0.0
        %714 = vmatpush1.msra.mxu0 0.0
        %715 = vmatprep.subr.mxu0 0.0
        %716 = vmatpush1.msra.mxu0 0.0
        %717 = vmatprep.subr.mxu0 0.0
        %718 = vmatpush1.msra.mxu0 0.0
        %719 = vmatprep.subr.mxu0 0.0
        %720 = vmatpush1.msra.mxu0 0.0
        %721 = vmatprep.subr.mxu0 %v363
        %722 = vmatpush1.msra.mxu0 %v360
        %723 = vmatprep.subr.mxu0 0.0
        %724 = vmatpush2.msra.mxu0 0.0
        %725 = vmatprep.subr.mxu0 0.0
        %726 = vmatpush2.msra.mxu0 0.0
        %727 = vmatprep.subr.mxu0 0.0
        %728 = vmatpush2.msra.mxu0 0.0
        %729 = vmatprep.subr.mxu0 0.0
        %730 = vmatpush2.msra.mxu0 0.0
        %731 = vmatprep.subr.mxu0 0.0
        %732 = vmatpush2.msra.mxu0 0.0
        %733 = vmatprep.subr.mxu0 0.0
        %734 = vmatpush2.msra.mxu0 0.0
        %735 = vmatprep.subr.mxu0 0.0
        %736 = vmatpush2.msra.mxu0 0.0
        %737 = vmatprep.subr.mxu0 0.0
        %738 = vmatpush2.msra.mxu0 0.0
        %739 = vmatprep.subr.mxu0 0.0
        %740 = vmatpush2.msra.mxu0 0.0
        %741 = vmatprep.subr.mxu0 0.0
        %742 = vmatpush2.msra.mxu0 0.0
        %743 = vmatprep.subr.mxu0 0.0
        %744 = vmatpush2.msra.mxu0 0.0
        %745 = vmatprep.subr.mxu0 0.0
        %746 = vmatpush2.msra.mxu0 0.0
        %747 = vmatprep.subr.mxu0 0.0
        %748 = vmatpush2.msra.mxu0 0.0
        %749 = vmatprep.subr.mxu0 0.0
        %750 = vmatpush2.msra.mxu0 0.0
        %751 = vmatprep.subr.mxu0 0.0
        %752 = vmatpush2.msra.mxu0 0.0
        %753 = vmatprep.subr.mxu0 0.0
        %754 = vmatpush2.msra.mxu0 0.0
        %755 = vmatprep.mubr.f32.mxu0 0.0
        %756 = vmatmul.mubr.f32.gmra.mxu0 %v329
        %v757 = vpop.f32.mrf.mxu0
        %v758 = vadd.f32 %v320, %v757
        %v759 = vpop.f32.mrf.mxu0
        %v760 = vadd.f32 %v320, %v759
        %761 = vmatprep.mubr.f32.mxu0 0.0
        %762 = vmatmul.mubr.f32.gmra.mxu0 %v332
        %v763 = vpop.f32.mrf.mxu0
        %v764 = vadd.f32 %v325, %v763
        %v765 = vpop.f32.mrf.mxu0
        %v766 = vadd.f32 %v325, %v765
        %767 = vdwg.mxu0
        %768 = vmatprep.subr.mxu0 0.0
        %769 = vmatpush1.msra.mxu0 0.0
        %770 = vmatprep.subr.mxu0 0.0
        %771 = vmatpush1.msra.mxu0 0.0
        %772 = vmatprep.subr.mxu0 0.0
        %773 = vmatpush1.msra.mxu0 0.0
        %774 = vmatprep.subr.mxu0 0.0
        %775 = vmatpush1.msra.mxu0 0.0
        %776 = vmatprep.subr.mxu0 0.0
        %777 = vmatpush1.msra.mxu0 0.0
        %778 = vmatprep.subr.mxu0 0.0
        %779 = vmatpush1.msra.mxu0 0.0
        %780 = vmatprep.subr.mxu0 0.0
        %781 = vmatpush1.msra.mxu0 0.0
        %782 = vmatprep.subr.mxu0 0.0
        %783 = vmatpush1.msra.mxu0 0.0
        %784 = vmatprep.subr.mxu0 0.0
        %785 = vmatpush1.msra.mxu0 0.0
        %786 = vmatprep.subr.mxu0 0.0
        %787 = vmatpush1.msra.mxu0 0.0
        %788 = vmatprep.subr.mxu0 0.0
        %789 = vmatpush1.msra.mxu0 0.0
        %790 = vmatprep.subr.mxu0 0.0
        %791 = vmatpush1.msra.mxu0 0.0
        %792 = vmatprep.subr.mxu0 0.0
        %793 = vmatpush1.msra.mxu0 0.0
        %794 = vmatprep.subr.mxu0 0.0
        %795 = vmatpush1.msra.mxu0 0.0
        %796 = vmatprep.subr.mxu0 0.0
        %797 = vmatpush1.msra.mxu0 0.0
        %798 = vmatprep.subr.mxu0 %v369
        %799 = vmatpush1.msra.mxu0 %v366
        %800 = vmatprep.subr.mxu0 0.0
        %801 = vmatpush2.msra.mxu0 0.0
        %802 = vmatprep.subr.mxu0 0.0
        %803 = vmatpush2.msra.mxu0 0.0
        %804 = vmatprep.subr.mxu0 0.0
        %805 = vmatpush2.msra.mxu0 0.0
        %806 = vmatprep.subr.mxu0 0.0
        %807 = vmatpush2.msra.mxu0 0.0
        %808 = vmatprep.subr.mxu0 0.0
        %809 = vmatpush2.msra.mxu0 0.0
        %810 = vmatprep.subr.mxu0 0.0
        %811 = vmatpush2.msra.mxu0 0.0
        %812 = vmatprep.subr.mxu0 0.0
        %813 = vmatpush2.msra.mxu0 0.0
        %814 = vmatprep.subr.mxu0 0.0
        %815 = vmatpush2.msra.mxu0 0.0
        %816 = vmatprep.subr.mxu0 0.0
        %817 = vmatpush2.msra.mxu0 0.0
        %818 = vmatprep.subr.mxu0 0.0
        %819 = vmatpush2.msra.mxu0 0.0
        %820 = vmatprep.subr.mxu0 0.0
        %821 = vmatpush2.msra.mxu0 0.0
        %822 = vmatprep.subr.mxu0 0.0
        %823 = vmatpush2.msra.mxu0 0.0
        %824 = vmatprep.subr.mxu0 0.0
        %825 = vmatpush2.msra.mxu0 0.0
        %826 = vmatprep.subr.mxu0 0.0
        %827 = vmatpush2.msra.mxu0 0.0
        %828 = vmatprep.subr.mxu0 0.0
        %829 = vmatpush2.msra.mxu0 0.0
        %830 = vmatprep.subr.mxu0 0.0
        %831 = vmatpush2.msra.mxu0 0.0
        %832 = vmatprep.mubr.f32.mxu0 0.0
        %833 = vmatmul.mubr.f32.gmra.mxu0 %v329
        %v834 = vpop.f32.mrf.mxu0
        %v835 = vadd.f32 %v320, %v834
        %v836 = vpop.f32.mrf.mxu0
        %v837 = vadd.f32 %v320, %v836
        %838 = vmatprep.mubr.f32.mxu0 0.0
        %839 = vmatmul.mubr.f32.gmra.mxu0 %v332
        %v840 = vpop.f32.mrf.mxu0
        %v841 = vadd.f32 %v325, %v840
        %v842 = vpop.f32.mrf.mxu0
        %v843 = vadd.f32 %v325, %v842
        %844 = vdwg.mxu0
        %845 = vmatprep.subr.mxu0 0.0
        %846 = vmatpush1.msra.mxu0 0.0
        %847 = vmatprep.subr.mxu0 0.0
        %848 = vmatpush1.msra.mxu0 0.0
        %849 = vmatprep.subr.mxu0 0.0
        %850 = vmatpush1.msra.mxu0 0.0
        %851 = vmatprep.subr.mxu0 0.0
        %852 = vmatpush1.msra.mxu0 0.0
        %853 = vmatprep.subr.mxu0 0.0
        %854 = vmatpush1.msra.mxu0 0.0
        %855 = vmatprep.subr.mxu0 0.0
        %856 = vmatpush1.msra.mxu0 0.0
        %857 = vmatprep.subr.mxu0 0.0
        %858 = vmatpush1.msra.mxu0 0.0
        %859 = vmatprep.subr.mxu0 0.0
        %860 = vmatpush1.msra.mxu0 0.0
        %861 = vmatprep.subr.mxu0 0.0
        %862 = vmatpush1.msra.mxu0 0.0
        %863 = vmatprep.subr.mxu0 0.0
        %864 = vmatpush1.msra.mxu0 0.0
        %865 = vmatprep.subr.mxu0 0.0
        %866 = vmatpush1.msra.mxu0 0.0
        %867 = vmatprep.subr.mxu0 0.0
        %868 = vmatpush1.msra.mxu0 0.0
        %869 = vmatprep.subr.mxu0 0.0
        %870 = vmatpush1.msra.mxu0 0.0
        %871 = vmatprep.subr.mxu0 0.0
        %872 = vmatpush1.msra.mxu0 0.0
        %873 = vmatprep.subr.mxu0 0.0
        %874 = vmatpush1.msra.mxu0 0.0
        %875 = vmatprep.subr.mxu0 %v375
        %876 = vmatpush1.msra.mxu0 %v372
        %877 = vmatprep.subr.mxu0 0.0
        %878 = vmatpush2.msra.mxu0 0.0
        %879 = vmatprep.subr.mxu0 0.0
        %880 = vmatpush2.msra.mxu0 0.0
        %881 = vmatprep.subr.mxu0 0.0
        %882 = vmatpush2.msra.mxu0 0.0
        %883 = vmatprep.subr.mxu0 0.0
        %884 = vmatpush2.msra.mxu0 0.0
        %885 = vmatprep.subr.mxu0 0.0
        %886 = vmatpush2.msra.mxu0 0.0
        %887 = vmatprep.subr.mxu0 0.0
        %888 = vmatpush2.msra.mxu0 0.0
        %889 = vmatprep.subr.mxu0 0.0
        %890 = vmatpush2.msra.mxu0 0.0
        %891 = vmatprep.subr.mxu0 0.0
        %892 = vmatpush2.msra.mxu0 0.0
        %893 = vmatprep.subr.mxu0 0.0
        %894 = vmatpush2.msra.mxu0 0.0
        %895 = vmatprep.subr.mxu0 0.0
        %896 = vmatpush2.msra.mxu0 0.0
        %897 = vmatprep.subr.mxu0 0.0
        %898 = vmatpush2.msra.mxu0 0.0
        %899 = vmatprep.subr.mxu0 0.0
        %900 = vmatpush2.msra.mxu0 0.0
        %901 = vmatprep.subr.mxu0 0.0
        %902 = vmatpush2.msra.mxu0 0.0
        %903 = vmatprep.subr.mxu0 0.0
        %904 = vmatpush2.msra.mxu0 0.0
        %905 = vmatprep.subr.mxu0 0.0
        %906 = vmatpush2.msra.mxu0 0.0
        %907 = vmatprep.subr.mxu0 0.0
        %908 = vmatpush2.msra.mxu0 0.0
        %909 = vmatprep.mubr.f32.mxu0 0.0
        %910 = vmatmul.mubr.f32.gmra.mxu0 %v329
        %v911 = vpop.f32.mrf.mxu0
        %v912 = vadd.f32 %v320, %v911
        %v913 = vpop.f32.mrf.mxu0
        %v914 = vadd.f32 %v320, %v913
        %915 = vmatprep.mubr.f32.mxu0 0.0
        %916 = vmatmul.mubr.f32.gmra.mxu0 %v332
        %v917 = vpop.f32.mrf.mxu0
        %v918 = vadd.f32 %v325, %v917
        %v919 = vpop.f32.mrf.mxu0
        %v920 = vadd.f32 %v325, %v919
        %921 = vdwg.mxu0
        %922 = vmatprep.subr.mxu0 0.0
        %923 = vmatpush1.msra.mxu0 0.0
        %924 = vmatprep.subr.mxu0 0.0
        %925 = vmatpush1.msra.mxu0 0.0
        %926 = vmatprep.subr.mxu0 0.0
        %927 = vmatpush1.msra.mxu0 0.0
        %928 = vmatprep.subr.mxu0 0.0
        %929 = vmatpush1.msra.mxu0 0.0
        %930 = vmatprep.subr.mxu0 0.0
        %931 = vmatpush1.msra.mxu0 0.0
        %932 = vmatprep.subr.mxu0 0.0
        %933 = vmatpush1.msra.mxu0 0.0
        %934 = vmatprep.subr.mxu0 0.0
        %935 = vmatpush1.msra.mxu0 0.0
        %936 = vmatprep.subr.mxu0 0.0
        %937 = vmatpush1.msra.mxu0 0.0
        %938 = vmatprep.subr.mxu0 0.0
        %939 = vmatpush1.msra.mxu0 0.0
        %940 = vmatprep.subr.mxu0 0.0
        %941 = vmatpush1.msra.mxu0 0.0
        %942 = vmatprep.subr.mxu0 0.0
        %943 = vmatpush1.msra.mxu0 0.0
        %944 = vmatprep.subr.mxu0 0.0
        %945 = vmatpush1.msra.mxu0 0.0
        %946 = vmatprep.subr.mxu0 0.0
        %947 = vmatpush1.msra.mxu0 0.0
        %948 = vmatprep.subr.mxu0 0.0
        %949 = vmatpush1.msra.mxu0 0.0
        %950 = vmatprep.subr.mxu0 0.0
        %951 = vmatpush1.msra.mxu0 0.0
        %952 = vmatprep.subr.mxu0 %v381
        %953 = vmatpush1.msra.mxu0 %v378
        %954 = vmatprep.subr.mxu0 0.0
        %955 = vmatpush2.msra.mxu0 0.0
        %956 = vmatprep.subr.mxu0 0.0
        %957 = vmatpush2.msra.mxu0 0.0
        %958 = vmatprep.subr.mxu0 0.0
        %959 = vmatpush2.msra.mxu0 0.0
        %960 = vmatprep.subr.mxu0 0.0
        %961 = vmatpush2.msra.mxu0 0.0
        %962 = vmatprep.subr.mxu0 0.0
        %963 = vmatpush2.msra.mxu0 0.0
        %964 = vmatprep.subr.mxu0 0.0
        %965 = vmatpush2.msra.mxu0 0.0
        %966 = vmatprep.subr.mxu0 0.0
        %967 = vmatpush2.msra.mxu0 0.0
        %968 = vmatprep.subr.mxu0 0.0
        %969 = vmatpush2.msra.mxu0 0.0
        %970 = vmatprep.subr.mxu0 0.0
        %971 = vmatpush2.msra.mxu0 0.0
        %972 = vmatprep.subr.mxu0 0.0
        %973 = vmatpush2.msra.mxu0 0.0
        %974 = vmatprep.subr.mxu0 0.0
        %975 = vmatpush2.msra.mxu0 0.0
        %976 = vmatprep.subr.mxu0 0.0
        %977 = vmatpush2.msra.mxu0 0.0
        %978 = vmatprep.subr.mxu0 0.0
        %979 = vmatpush2.msra.mxu0 0.0
        %980 = vmatprep.subr.mxu0 0.0
        %981 = vmatpush2.msra.mxu0 0.0
        %982 = vmatprep.subr.mxu0 0.0
        %983 = vmatpush2.msra.mxu0 0.0
        %984 = vmatprep.subr.mxu0 0.0
        %985 = vmatpush2.msra.mxu0 0.0
        %986 = vmatprep.mubr.f32.mxu0 0.0
        %987 = vmatmul.mubr.f32.gmra.mxu0 %v329
        %v988 = vpop.f32.mrf.mxu0
        %v989 = vadd.f32 %v320, %v988
        %v990 = vpop.f32.mrf.mxu0
        %v991 = vadd.f32 %v320, %v990
        %992 = vmatprep.mubr.f32.mxu0 0.0
        %993 = vmatmul.mubr.f32.gmra.mxu0 %v332
        %v994 = vpop.f32.mrf.mxu0
        %v995 = vadd.f32 %v325, %v994
        %v996 = vpop.f32.mrf.mxu0
        %v997 = vadd.f32 %v325, %v996
        %998 = vdwg.mxu0
        %v999 = vmax.f32 %v450, 0.0
        %v1000 = vmax.f32 %v452, 0.0
        %v1001 = vmax.f32 %v527, 0.0
        %v1002 = vmax.f32 %v529, 0.0
        %v1003 = vmax.f32 %v604, 0.0
        %v1004 = vmax.f32 %v606, 0.0
        %v1005 = vmax.f32 %v681, 0.0
        %v1006 = vmax.f32 %v683, 0.0
        %v1007 = vmax.f32 %v758, 0.0
        %v1008 = vmax.f32 %v760, 0.0
        %v1009 = vmax.f32 %v835, 0.0
        %v1010 = vmax.f32 %v837, 0.0
        %v1011 = vmax.f32 %v912, 0.0
        %v1012 = vmax.f32 %v914, 0.0
        %v1013 = vmax.f32 %v989, 0.0
        %v1014 = vmax.f32 %v991, 0.0
        %v1015 = vmax.f32 %v456, 0.0
        %v1016 = vmax.f32 %v458, 0.0
        %v1017 = vmax.f32 %v533, 0.0
        %v1018 = vmax.f32 %v535, 0.0
        %v1019 = vmax.f32 %v610, 0.0
        %v1020 = vmax.f32 %v612, 0.0
        %v1021 = vmax.f32 %v687, 0.0
        %v1022 = vmax.f32 %v689, 0.0
        %v1023 = vmax.f32 %v764, 0.0
        %v1024 = vmax.f32 %v766, 0.0
        %v1025 = vmax.f32 %v841, 0.0
        %v1026 = vmax.f32 %v843, 0.0
        %v1027 = vmax.f32 %v918, 0.0
        %v1028 = vmax.f32 %v920, 0.0
        %v1029 = vmax.f32 %v995, 0.0
        %v1030 = vmax.f32 %v997, 0.0
        %v1031 = vld [vmem:[%s3] sm:$0xff]
        %v1032 = vld [vmem:[%s4] sm:$0xff]
        %1034 = vset.pattern.permute.xlu0 0
        %1035 = vperm.xlu0 %1034, %v1032
        %v1036 = vpop.permute.xlu0 %1035
        %vm1038 = vcmask 130048
        %v1040 = vsel %vm1038, %v1031, 0
        %1042 = vmatprep.subr.mxu0 0.0
        %1043 = vmatpush1.msra.mxu0 0.0
        %1044 = vmatprep.subr.mxu0 0.0
        %1045 = vmatpush1.msra.mxu0 0.0
        %1046 = vmatprep.subr.mxu0 0.0
        %1047 = vmatpush1.msra.mxu0 0.0
        %1048 = vmatprep.subr.mxu0 0.0
        %1049 = vmatpush1.msra.mxu0 0.0
        %1050 = vmatprep.subr.mxu0 0.0
        %1051 = vmatpush1.msra.mxu0 0.0
        %1052 = vmatprep.subr.mxu0 0.0
        %1053 = vmatpush1.msra.mxu0 0.0
        %1054 = vmatprep.subr.mxu0 0.0
        %1055 = vmatpush1.msra.mxu0 0.0
        %1056 = vmatprep.subr.mxu0 0.0
        %1057 = vmatpush1.msra.mxu0 0.0
        %1058 = vmatprep.subr.mxu0 0.0
        %1059 = vmatpush1.msra.mxu0 0.0
        %1060 = vmatprep.subr.mxu0 0.0
        %1061 = vmatpush1.msra.mxu0 0.0
        %1062 = vmatprep.subr.mxu0 0.0
        %1063 = vmatpush1.msra.mxu0 0.0
        %1064 = vmatprep.subr.mxu0 0.0
        %1065 = vmatpush1.msra.mxu0 0.0
        %1066 = vmatprep.subr.mxu0 0.0
        %1067 = vmatpush1.msra.mxu0 0.0
        %1068 = vmatprep.subr.mxu0 0.0
        %1069 = vmatpush1.msra.mxu0 0.0
        %1070 = vmatprep.subr.mxu0 %v1016
        %1071 = vmatpush1.msra.mxu0 %v1015
        %1072 = vmatprep.subr.mxu0 %v1000
        %1073 = vmatpush1.msra.mxu0 %v999
        %1074 = vmatprep.subr.mxu0 0.0
        %1075 = vmatpush2.msra.mxu0 0.0
        %1076 = vmatprep.subr.mxu0 0.0
        %1077 = vmatpush2.msra.mxu0 0.0
        %1078 = vmatprep.subr.mxu0 0.0
        %1079 = vmatpush2.msra.mxu0 0.0
        %1080 = vmatprep.subr.mxu0 0.0
        %1081 = vmatpush2.msra.mxu0 0.0
        %1082 = vmatprep.subr.mxu0 0.0
        %1083 = vmatpush2.msra.mxu0 0.0
        %1084 = vmatprep.subr.mxu0 0.0
        %1085 = vmatpush2.msra.mxu0 0.0
        %1086 = vmatprep.subr.mxu0 0.0
        %1087 = vmatpush2.msra.mxu0 0.0
        %1088 = vmatprep.subr.mxu0 0.0
        %1089 = vmatpush2.msra.mxu0 0.0
        %1090 = vmatprep.subr.mxu0 0.0
        %1091 = vmatpush2.msra.mxu0 0.0
        %1092 = vmatprep.subr.mxu0 0.0
        %1093 = vmatpush2.msra.mxu0 0.0
        %1094 = vmatprep.subr.mxu0 0.0
        %1095 = vmatpush2.msra.mxu0 0.0
        %1096 = vmatprep.subr.mxu0 0.0
        %1097 = vmatpush2.msra.mxu0 0.0
        %1098 = vmatprep.subr.mxu0 0.0
        %1099 = vmatpush2.msra.mxu0 0.0
        %1100 = vmatprep.subr.mxu0 0.0
        %1101 = vmatpush2.msra.mxu0 0.0
        %1102 = vmatprep.subr.mxu0 0.0
        %1103 = vmatpush2.msra.mxu0 0.0
        %1104 = vmatprep.subr.mxu0 0.0
        %1105 = vmatpush2.msra.mxu0 0.0
        %1106 = vmatprep.mubr.f32.mxu0 0.0
        %1107 = vmatmul.mubr.f32.gmra.mxu0 %v1040
        %v1108 = vpop.f32.mrf.mxu0
        %v1109 = vadd.f32 %v1036, %v1108
        %v1110 = vpop.f32.mrf.mxu0
        %v1111 = vadd.f32 %v1036, %v1110
        %1112 = vdwg.mxu0
        %1113 = vmatprep.subr.mxu0 0.0
        %1114 = vmatpush1.msra.mxu0 0.0
        %1115 = vmatprep.subr.mxu0 0.0
        %1116 = vmatpush1.msra.mxu0 0.0
        %1117 = vmatprep.subr.mxu0 0.0
        %1118 = vmatpush1.msra.mxu0 0.0
        %1119 = vmatprep.subr.mxu0 0.0
        %1120 = vmatpush1.msra.mxu0 0.0
        %1121 = vmatprep.subr.mxu0 0.0
        %1122 = vmatpush1.msra.mxu0 0.0
        %1123 = vmatprep.subr.mxu0 0.0
        %1124 = vmatpush1.msra.mxu0 0.0
        %1125 = vmatprep.subr.mxu0 0.0
        %1126 = vmatpush1.msra.mxu0 0.0
        %1127 = vmatprep.subr.mxu0 0.0
        %1128 = vmatpush1.msra.mxu0 0.0
        %1129 = vmatprep.subr.mxu0 0.0
        %1130 = vmatpush1.msra.mxu0 0.0
        %1131 = vmatprep.subr.mxu0 0.0
        %1132 = vmatpush1.msra.mxu0 0.0
        %1133 = vmatprep.subr.mxu0 0.0
        %1134 = vmatpush1.msra.mxu0 0.0
        %1135 = vmatprep.subr.mxu0 0.0
        %1136 = vmatpush1.msra.mxu0 0.0
        %1137 = vmatprep.subr.mxu0 0.0
        %1138 = vmatpush1.msra.mxu0 0.0
        %1139 = vmatprep.subr.mxu0 0.0
        %1140 = vmatpush1.msra.mxu0 0.0
        %1141 = vmatprep.subr.mxu0 %v1018
        %1142 = vmatpush1.msra.mxu0 %v1017
        %1143 = vmatprep.subr.mxu0 %v1002
        %1144 = vmatpush1.msra.mxu0 %v1001
        %1145 = vmatprep.subr.mxu0 0.0
        %1146 = vmatpush2.msra.mxu0 0.0
        %1147 = vmatprep.subr.mxu0 0.0
        %1148 = vmatpush2.msra.mxu0 0.0
        %1149 = vmatprep.subr.mxu0 0.0
        %1150 = vmatpush2.msra.mxu0 0.0
        %1151 = vmatprep.subr.mxu0 0.0
        %1152 = vmatpush2.msra.mxu0 0.0
        %1153 = vmatprep.subr.mxu0 0.0
        %1154 = vmatpush2.msra.mxu0 0.0
        %1155 = vmatprep.subr.mxu0 0.0
        %1156 = vmatpush2.msra.mxu0 0.0
        %1157 = vmatprep.subr.mxu0 0.0
        %1158 = vmatpush2.msra.mxu0 0.0
        %1159 = vmatprep.subr.mxu0 0.0
        %1160 = vmatpush2.msra.mxu0 0.0
        %1161 = vmatprep.subr.mxu0 0.0
        %1162 = vmatpush2.msra.mxu0 0.0
        %1163 = vmatprep.subr.mxu0 0.0
        %1164 = vmatpush2.msra.mxu0 0.0
        %1165 = vmatprep.subr.mxu0 0.0
        %1166 = vmatpush2.msra.mxu0 0.0
        %1167 = vmatprep.subr.mxu0 0.0
        %1168 = vmatpush2.msra.mxu0 0.0
        %1169 = vmatprep.subr.mxu0 0.0
        %1170 = vmatpush2.msra.mxu0 0.0
        %1171 = vmatprep.subr.mxu0 0.0
        %1172 = vmatpush2.msra.mxu0 0.0
        %1173 = vmatprep.subr.mxu0 0.0
        %1174 = vmatpush2.msra.mxu0 0.0
        %1175 = vmatprep.subr.mxu0 0.0
        %1176 = vmatpush2.msra.mxu0 0.0
        %1177 = vmatprep.mubr.f32.mxu0 0.0
        %1178 = vmatmul.mubr.f32.gmra.mxu0 %v1040
        %v1179 = vpop.f32.mrf.mxu0
        %v1180 = vadd.f32 %v1036, %v1179
        %v1181 = vpop.f32.mrf.mxu0
        %v1182 = vadd.f32 %v1036, %v1181
        %1183 = vdwg.mxu0
        %1184 = vmatprep.subr.mxu0 0.0
        %1185 = vmatpush1.msra.mxu0 0.0
        %1186 = vmatprep.subr.mxu0 0.0
        %1187 = vmatpush1.msra.mxu0 0.0
        %1188 = vmatprep.subr.mxu0 0.0
        %1189 = vmatpush1.msra.mxu0 0.0
        %1190 = vmatprep.subr.mxu0 0.0
        %1191 = vmatpush1.msra.mxu0 0.0
        %1192 = vmatprep.subr.mxu0 0.0
        %1193 = vmatpush1.msra.mxu0 0.0
        %1194 = vmatprep.subr.mxu0 0.0
        %1195 = vmatpush1.msra.mxu0 0.0
        %1196 = vmatprep.subr.mxu0 0.0
        %1197 = vmatpush1.msra.mxu0 0.0
        %1198 = vmatprep.subr.mxu0 0.0
        %1199 = vmatpush1.msra.mxu0 0.0
        %1200 = vmatprep.subr.mxu0 0.0
        %1201 = vmatpush1.msra.mxu0 0.0
        %1202 = vmatprep.subr.mxu0 0.0
        %1203 = vmatpush1.msra.mxu0 0.0
        %1204 = vmatprep.subr.mxu0 0.0
        %1205 = vmatpush1.msra.mxu0 0.0
        %1206 = vmatprep.subr.mxu0 0.0
        %1207 = vmatpush1.msra.mxu0 0.0
        %1208 = vmatprep.subr.mxu0 0.0
        %1209 = vmatpush1.msra.mxu0 0.0
        %1210 = vmatprep.subr.mxu0 0.0
        %1211 = vmatpush1.msra.mxu0 0.0
        %1212 = vmatprep.subr.mxu0 %v1020
        %1213 = vmatpush1.msra.mxu0 %v1019
        %1214 = vmatprep.subr.mxu0 %v1004
        %1215 = vmatpush1.msra.mxu0 %v1003
        %1216 = vmatprep.subr.mxu0 0.0
        %1217 = vmatpush2.msra.mxu0 0.0
        %1218 = vmatprep.subr.mxu0 0.0
        %1219 = vmatpush2.msra.mxu0 0.0
        %1220 = vmatprep.subr.mxu0 0.0
        %1221 = vmatpush2.msra.mxu0 0.0
        %1222 = vmatprep.subr.mxu0 0.0
        %1223 = vmatpush2.msra.mxu0 0.0
        %1224 = vmatprep.subr.mxu0 0.0
        %1225 = vmatpush2.msra.mxu0 0.0
        %1226 = vmatprep.subr.mxu0 0.0
        %1227 = vmatpush2.msra.mxu0 0.0
        %1228 = vmatprep.subr.mxu0 0.0
        %1229 = vmatpush2.msra.mxu0 0.0
        %1230 = vmatprep.subr.mxu0 0.0
        %1231 = vmatpush2.msra.mxu0 0.0
        %1232 = vmatprep.subr.mxu0 0.0
        %1233 = vmatpush2.msra.mxu0 0.0
        %1234 = vmatprep.subr.mxu0 0.0
        %1235 = vmatpush2.msra.mxu0 0.0
        %1236 = vmatprep.subr.mxu0 0.0
        %1237 = vmatpush2.msra.mxu0 0.0
        %1238 = vmatprep.subr.mxu0 0.0
        %1239 = vmatpush2.msra.mxu0 0.0
        %1240 = vmatprep.subr.mxu0 0.0
        %1241 = vmatpush2.msra.mxu0 0.0
        %1242 = vmatprep.subr.mxu0 0.0
        %1243 = vmatpush2.msra.mxu0 0.0
        %1244 = vmatprep.subr.mxu0 0.0
        %1245 = vmatpush2.msra.mxu0 0.0
        %1246 = vmatprep.subr.mxu0 0.0
        %1247 = vmatpush2.msra.mxu0 0.0
        %1248 = vmatprep.mubr.f32.mxu0 0.0
        %1249 = vmatmul.mubr.f32.gmra.mxu0 %v1040
        %v1250 = vpop.f32.mrf.mxu0
        %v1251 = vadd.f32 %v1036, %v1250
        %v1252 = vpop.f32.mrf.mxu0
        %v1253 = vadd.f32 %v1036, %v1252
        %1254 = vdwg.mxu0
        %1255 = vmatprep.subr.mxu0 0.0
        %1256 = vmatpush1.msra.mxu0 0.0
        %1257 = vmatprep.subr.mxu0 0.0
        %1258 = vmatpush1.msra.mxu0 0.0
        %1259 = vmatprep.subr.mxu0 0.0
        %1260 = vmatpush1.msra.mxu0 0.0
        %1261 = vmatprep.subr.mxu0 0.0
        %1262 = vmatpush1.msra.mxu0 0.0
        %1263 = vmatprep.subr.mxu0 0.0
        %1264 = vmatpush1.msra.mxu0 0.0
        %1265 = vmatprep.subr.mxu0 0.0
        %1266 = vmatpush1.msra.mxu0 0.0
        %1267 = vmatprep.subr.mxu0 0.0
        %1268 = vmatpush1.msra.mxu0 0.0
        %1269 = vmatprep.subr.mxu0 0.0
        %1270 = vmatpush1.msra.mxu0 0.0
        %1271 = vmatprep.subr.mxu0 0.0
        %1272 = vmatpush1.msra.mxu0 0.0
        %1273 = vmatprep.subr.mxu0 0.0
        %1274 = vmatpush1.msra.mxu0 0.0
        %1275 = vmatprep.subr.mxu0 0.0
        %1276 = vmatpush1.msra.mxu0 0.0
        %1277 = vmatprep.subr.mxu0 0.0
        %1278 = vmatpush1.msra.mxu0 0.0
        %1279 = vmatprep.subr.mxu0 0.0
        %1280 = vmatpush1.msra.mxu0 0.0
        %1281 = vmatprep.subr.mxu0 0.0
        %1282 = vmatpush1.msra.mxu0 0.0
        %1283 = vmatprep.subr.mxu0 %v1022
        %1284 = vmatpush1.msra.mxu0 %v1021
        %1285 = vmatprep.subr.mxu0 %v1006
        %1286 = vmatpush1.msra.mxu0 %v1005
        %1287 = vmatprep.subr.mxu0 0.0
        %1288 = vmatpush2.msra.mxu0 0.0
        %1289 = vmatprep.subr.mxu0 0.0
        %1290 = vmatpush2.msra.mxu0 0.0
        %1291 = vmatprep.subr.mxu0 0.0
        %1292 = vmatpush2.msra.mxu0 0.0
        %1293 = vmatprep.subr.mxu0 0.0
        %1294 = vmatpush2.msra.mxu0 0.0
        %1295 = vmatprep.subr.mxu0 0.0
        %1296 = vmatpush2.msra.mxu0 0.0
        %1297 = vmatprep.subr.mxu0 0.0
        %1298 = vmatpush2.msra.mxu0 0.0
        %1299 = vmatprep.subr.mxu0 0.0
        %1300 = vmatpush2.msra.mxu0 0.0
        %1301 = vmatprep.subr.mxu0 0.0
        %1302 = vmatpush2.msra.mxu0 0.0
        %1303 = vmatprep.subr.mxu0 0.0
        %1304 = vmatpush2.msra.mxu0 0.0
        %1305 = vmatprep.subr.mxu0 0.0
        %1306 = vmatpush2.msra.mxu0 0.0
        %1307 = vmatprep.subr.mxu0 0.0
        %1308 = vmatpush2.msra.mxu0 0.0
        %1309 = vmatprep.subr.mxu0 0.0
        %1310 = vmatpush2.msra.mxu0 0.0
        %1311 = vmatprep.subr.mxu0 0.0
        %1312 = vmatpush2.msra.mxu0 0.0
        %1313 = vmatprep.subr.mxu0 0.0
        %1314 = vmatpush2.msra.mxu0 0.0
        %1315 = vmatprep.subr.mxu0 0.0
        %1316 = vmatpush2.msra.mxu0 0.0
        %1317 = vmatprep.subr.mxu0 0.0
        %1318 = vmatpush2.msra.mxu0 0.0
        %1319 = vmatprep.mubr.f32.mxu0 0.0
        %1320 = vmatmul.mubr.f32.gmra.mxu0 %v1040
        %v1321 = vpop.f32.mrf.mxu0
        %v1322 = vadd.f32 %v1036, %v1321
        %v1323 = vpop.f32.mrf.mxu0
        %v1324 = vadd.f32 %v1036, %v1323
        %1325 = vdwg.mxu0
        %1326 = vmatprep.subr.mxu0 0.0
        %1327 = vmatpush1.msra.mxu0 0.0
        %1328 = vmatprep.subr.mxu0 0.0
        %1329 = vmatpush1.msra.mxu0 0.0
        %1330 = vmatprep.subr.mxu0 0.0
        %1331 = vmatpush1.msra.mxu0 0.0
        %1332 = vmatprep.subr.mxu0 0.0
        %1333 = vmatpush1.msra.mxu0 0.0
        %1334 = vmatprep.subr.mxu0 0.0
        %1335 = vmatpush1.msra.mxu0 0.0
        %1336 = vmatprep.subr.mxu0 0.0
        %1337 = vmatpush1.msra.mxu0 0.0
        %1338 = vmatprep.subr.mxu0 0.0
        %1339 = vmatpush1.msra.mxu0 0.0
        %1340 = vmatprep.subr.mxu0 0.0
        %1341 = vmatpush1.msra.mxu0 0.0
        %1342 = vmatprep.subr.mxu0 0.0
        %1343 = vmatpush1.msra.mxu0 0.0
        %1344 = vmatprep.subr.mxu0 0.0
        %1345 = vmatpush1.msra.mxu0 0.0
        %1346 = vmatprep.subr.mxu0 0.0
        %1347 = vmatpush1.msra.mxu0 0.0
        %1348 = vmatprep.subr.mxu0 0.0
        %1349 = vmatpush1.msra.mxu0 0.0
        %1350 = vmatprep.subr.mxu0 0.0
        %1351 = vmatpush1.msra.mxu0 0.0
        %1352 = vmatprep.subr.mxu0 0.0
        %1353 = vmatpush1.msra.mxu0 0.0
        %1354 = vmatprep.subr.mxu0 %v1024
        %1355 = vmatpush1.msra.mxu0 %v1023
        %1356 = vmatprep.subr.mxu0 %v1008
        %1357 = vmatpush1.msra.mxu0 %v1007
        %1358 = vmatprep.subr.mxu0 0.0
        %1359 = vmatpush2.msra.mxu0 0.0
        %1360 = vmatprep.subr.mxu0 0.0
        %1361 = vmatpush2.msra.mxu0 0.0
        %1362 = vmatprep.subr.mxu0 0.0
        %1363 = vmatpush2.msra.mxu0 0.0
        %1364 = vmatprep.subr.mxu0 0.0
        %1365 = vmatpush2.msra.mxu0 0.0
        %1366 = vmatprep.subr.mxu0 0.0
        %1367 = vmatpush2.msra.mxu0 0.0
        %1368 = vmatprep.subr.mxu0 0.0
        %1369 = vmatpush2.msra.mxu0 0.0
        %1370 = vmatprep.subr.mxu0 0.0
        %1371 = vmatpush2.msra.mxu0 0.0
        %1372 = vmatprep.subr.mxu0 0.0
        %1373 = vmatpush2.msra.mxu0 0.0
        %1374 = vmatprep.subr.mxu0 0.0
        %1375 = vmatpush2.msra.mxu0 0.0
        %1376 = vmatprep.subr.mxu0 0.0
        %1377 = vmatpush2.msra.mxu0 0.0
        %1378 = vmatprep.subr.mxu0 0.0
        %1379 = vmatpush2.msra.mxu0 0.0
        %1380 = vmatprep.subr.mxu0 0.0
        %1381 = vmatpush2.msra.mxu0 0.0
        %1382 = vmatprep.subr.mxu0 0.0
        %1383 = vmatpush2.msra.mxu0 0.0
        %1384 = vmatprep.subr.mxu0 0.0
        %1385 = vmatpush2.msra.mxu0 0.0
        %1386 = vmatprep.subr.mxu0 0.0
        %1387 = vmatpush2.msra.mxu0 0.0
        %1388 = vmatprep.subr.mxu0 0.0
        %1389 = vmatpush2.msra.mxu0 0.0
        %1390 = vmatprep.mubr.f32.mxu0 0.0
        %1391 = vmatmul.mubr.f32.gmra.mxu0 %v1040
        %v1392 = vpop.f32.mrf.mxu0
        %v1393 = vadd.f32 %v1036, %v1392
        %v1394 = vpop.f32.mrf.mxu0
        %v1395 = vadd.f32 %v1036, %v1394
        %1396 = vdwg.mxu0
        %1397 = vmatprep.subr.mxu0 0.0
        %1398 = vmatpush1.msra.mxu0 0.0
        %1399 = vmatprep.subr.mxu0 0.0
        %1400 = vmatpush1.msra.mxu0 0.0
        %1401 = vmatprep.subr.mxu0 0.0
        %1402 = vmatpush1.msra.mxu0 0.0
        %1403 = vmatprep.subr.mxu0 0.0
        %1404 = vmatpush1.msra.mxu0 0.0
        %1405 = vmatprep.subr.mxu0 0.0
        %1406 = vmatpush1.msra.mxu0 0.0
        %1407 = vmatprep.subr.mxu0 0.0
        %1408 = vmatpush1.msra.mxu0 0.0
        %1409 = vmatprep.subr.mxu0 0.0
        %1410 = vmatpush1.msra.mxu0 0.0
        %1411 = vmatprep.subr.mxu0 0.0
        %1412 = vmatpush1.msra.mxu0 0.0
        %1413 = vmatprep.subr.mxu0 0.0
        %1414 = vmatpush1.msra.mxu0 0.0
        %1415 = vmatprep.subr.mxu0 0.0
        %1416 = vmatpush1.msra.mxu0 0.0
        %1417 = vmatprep.subr.mxu0 0.0
        %1418 = vmatpush1.msra.mxu0 0.0
        %1419 = vmatprep.subr.mxu0 0.0
        %1420 = vmatpush1.msra.mxu0 0.0
        %1421 = vmatprep.subr.mxu0 0.0
        %1422 = vmatpush1.msra.mxu0 0.0
        %1423 = vmatprep.subr.mxu0 0.0
        %1424 = vmatpush1.msra.mxu0 0.0
        %1425 = vmatprep.subr.mxu0 %v1026
        %1426 = vmatpush1.msra.mxu0 %v1025
        %1427 = vmatprep.subr.mxu0 %v1010
        %1428 = vmatpush1.msra.mxu0 %v1009
        %1429 = vmatprep.subr.mxu0 0.0
        %1430 = vmatpush2.msra.mxu0 0.0
        %1431 = vmatprep.subr.mxu0 0.0
        %1432 = vmatpush2.msra.mxu0 0.0
        %1433 = vmatprep.subr.mxu0 0.0
        %1434 = vmatpush2.msra.mxu0 0.0
        %1435 = vmatprep.subr.mxu0 0.0
        %1436 = vmatpush2.msra.mxu0 0.0
        %1437 = vmatprep.subr.mxu0 0.0
        %1438 = vmatpush2.msra.mxu0 0.0
        %1439 = vmatprep.subr.mxu0 0.0
        %1440 = vmatpush2.msra.mxu0 0.0
        %1441 = vmatprep.subr.mxu0 0.0
        %1442 = vmatpush2.msra.mxu0 0.0
        %1443 = vmatprep.subr.mxu0 0.0
        %1444 = vmatpush2.msra.mxu0 0.0
        %1445 = vmatprep.subr.mxu0 0.0
        %1446 = vmatpush2.msra.mxu0 0.0
        %1447 = vmatprep.subr.mxu0 0.0
        %1448 = vmatpush2.msra.mxu0 0.0
        %1449 = vmatprep.subr.mxu0 0.0
        %1450 = vmatpush2.msra.mxu0 0.0
        %1451 = vmatprep.subr.mxu0 0.0
        %1452 = vmatpush2.msra.mxu0 0.0
        %1453 = vmatprep.subr.mxu0 0.0
        %1454 = vmatpush2.msra.mxu0 0.0
        %1455 = vmatprep.subr.mxu0 0.0
        %1456 = vmatpush2.msra.mxu0 0.0
        %1457 = vmatprep.subr.mxu0 0.0
        %1458 = vmatpush2.msra.mxu0 0.0
        %1459 = vmatprep.subr.mxu0 0.0
        %1460 = vmatpush2.msra.mxu0 0.0
        %1461 = vmatprep.mubr.f32.mxu0 0.0
        %1462 = vmatmul.mubr.f32.gmra.mxu0 %v1040
        %v1463 = vpop.f32.mrf.mxu0
        %v1464 = vadd.f32 %v1036, %v1463
        %v1465 = vpop.f32.mrf.mxu0
        %v1466 = vadd.f32 %v1036, %v1465
        %1467 = vdwg.mxu0
        %1468 = vmatprep.subr.mxu0 0.0
        %1469 = vmatpush1.msra.mxu0 0.0
        %1470 = vmatprep.subr.mxu0 0.0
        %1471 = vmatpush1.msra.mxu0 0.0
        %1472 = vmatprep.subr.mxu0 0.0
        %1473 = vmatpush1.msra.mxu0 0.0
        %1474 = vmatprep.subr.mxu0 0.0
        %1475 = vmatpush1.msra.mxu0 0.0
        %1476 = vmatprep.subr.mxu0 0.0
        %1477 = vmatpush1.msra.mxu0 0.0
        %1478 = vmatprep.subr.mxu0 0.0
        %1479 = vmatpush1.msra.mxu0 0.0
        %1480 = vmatprep.subr.mxu0 0.0
        %1481 = vmatpush1.msra.mxu0 0.0
        %1482 = vmatprep.subr.mxu0 0.0
        %1483 = vmatpush1.msra.mxu0 0.0
        %1484 = vmatprep.subr.mxu0 0.0
        %1485 = vmatpush1.msra.mxu0 0.0
        %1486 = vmatprep.subr.mxu0 0.0
        %1487 = vmatpush1.msra.mxu0 0.0
        %1488 = vmatprep.subr.mxu0 0.0
        %1489 = vmatpush1.msra.mxu0 0.0
        %1490 = vmatprep.subr.mxu0 0.0
        %1491 = vmatpush1.msra.mxu0 0.0
        %1492 = vmatprep.subr.mxu0 0.0
        %1493 = vmatpush1.msra.mxu0 0.0
        %1494 = vmatprep.subr.mxu0 0.0
        %1495 = vmatpush1.msra.mxu0 0.0
        %1496 = vmatprep.subr.mxu0 %v1028
        %1497 = vmatpush1.msra.mxu0 %v1027
        %1498 = vmatprep.subr.mxu0 %v1012
        %1499 = vmatpush1.msra.mxu0 %v1011
        %1500 = vmatprep.subr.mxu0 0.0
        %1501 = vmatpush2.msra.mxu0 0.0
        %1502 = vmatprep.subr.mxu0 0.0
        %1503 = vmatpush2.msra.mxu0 0.0
        %1504 = vmatprep.subr.mxu0 0.0
        %1505 = vmatpush2.msra.mxu0 0.0
        %1506 = vmatprep.subr.mxu0 0.0
        %1507 = vmatpush2.msra.mxu0 0.0
        %1508 = vmatprep.subr.mxu0 0.0
        %1509 = vmatpush2.msra.mxu0 0.0
        %1510 = vmatprep.subr.mxu0 0.0
        %1511 = vmatpush2.msra.mxu0 0.0
        %1512 = vmatprep.subr.mxu0 0.0
        %1513 = vmatpush2.msra.mxu0 0.0
        %1514 = vmatprep.subr.mxu0 0.0
        %1515 = vmatpush2.msra.mxu0 0.0
        %1516 = vmatprep.subr.mxu0 0.0
        %1517 = vmatpush2.msra.mxu0 0.0
        %1518 = vmatprep.subr.mxu0 0.0
        %1519 = vmatpush2.msra.mxu0 0.0
        %1520 = vmatprep.subr.mxu0 0.0
        %1521 = vmatpush2.msra.mxu0 0.0
        %1522 = vmatprep.subr.mxu0 0.0
        %1523 = vmatpush2.msra.mxu0 0.0
        %1524 = vmatprep.subr.mxu0 0.0
        %1525 = vmatpush2.msra.mxu0 0.0
        %1526 = vmatprep.subr.mxu0 0.0
        %1527 = vmatpush2.msra.mxu0 0.0
        %1528 = vmatprep.subr.mxu0 0.0
        %1529 = vmatpush2.msra.mxu0 0.0
        %1530 = vmatprep.subr.mxu0 0.0
        %1531 = vmatpush2.msra.mxu0 0.0
        %1532 = vmatprep.mubr.f32.mxu0 0.0
        %1533 = vmatmul.mubr.f32.gmra.mxu0 %v1040
        %v1534 = vpop.f32.mrf.mxu0
        %v1535 = vadd.f32 %v1036, %v1534
        %v1536 = vpop.f32.mrf.mxu0
        %v1537 = vadd.f32 %v1036, %v1536
        %1538 = vdwg.mxu0
        %1539 = vmatprep.subr.mxu0 0.0
        %1540 = vmatpush1.msra.mxu0 0.0
        %1541 = vmatprep.subr.mxu0 0.0
        %1542 = vmatpush1.msra.mxu0 0.0
        %1543 = vmatprep.subr.mxu0 0.0
        %1544 = vmatpush1.msra.mxu0 0.0
        %1545 = vmatprep.subr.mxu0 0.0
        %1546 = vmatpush1.msra.mxu0 0.0
        %1547 = vmatprep.subr.mxu0 0.0
        %1548 = vmatpush1.msra.mxu0 0.0
        %1549 = vmatprep.subr.mxu0 0.0
        %1550 = vmatpush1.msra.mxu0 0.0
        %1551 = vmatprep.subr.mxu0 0.0
        %1552 = vmatpush1.msra.mxu0 0.0
        %1553 = vmatprep.subr.mxu0 0.0
        %1554 = vmatpush1.msra.mxu0 0.0
        %1555 = vmatprep.subr.mxu0 0.0
        %1556 = vmatpush1.msra.mxu0 0.0
        %1557 = vmatprep.subr.mxu0 0.0
        %1558 = vmatpush1.msra.mxu0 0.0
        %1559 = vmatprep.subr.mxu0 0.0
        %1560 = vmatpush1.msra.mxu0 0.0
        %1561 = vmatprep.subr.mxu0 0.0
        %1562 = vmatpush1.msra.mxu0 0.0
        %1563 = vmatprep.subr.mxu0 0.0
        %1564 = vmatpush1.msra.mxu0 0.0
        %1565 = vmatprep.subr.mxu0 0.0
        %1566 = vmatpush1.msra.mxu0 0.0
        %1567 = vmatprep.subr.mxu0 %v1030
        %1568 = vmatpush1.msra.mxu0 %v1029
        %1569 = vmatprep.subr.mxu0 %v1014
        %1570 = vmatpush1.msra.mxu0 %v1013
        %1571 = vmatprep.subr.mxu0 0.0
        %1572 = vmatpush2.msra.mxu0 0.0
        %1573 = vmatprep.subr.mxu0 0.0
        %1574 = vmatpush2.msra.mxu0 0.0
        %1575 = vmatprep.subr.mxu0 0.0
        %1576 = vmatpush2.msra.mxu0 0.0
        %1577 = vmatprep.subr.mxu0 0.0
        %1578 = vmatpush2.msra.mxu0 0.0
        %1579 = vmatprep.subr.mxu0 0.0
        %1580 = vmatpush2.msra.mxu0 0.0
        %1581 = vmatprep.subr.mxu0 0.0
        %1582 = vmatpush2.msra.mxu0 0.0
        %1583 = vmatprep.subr.mxu0 0.0
        %1584 = vmatpush2.msra.mxu0 0.0
        %1585 = vmatprep.subr.mxu0 0.0
        %1586 = vmatpush2.msra.mxu0 0.0
        %1587 = vmatprep.subr.mxu0 0.0
        %1588 = vmatpush2.msra.mxu0 0.0
        %1589 = vmatprep.subr.mxu0 0.0
        %1590 = vmatpush2.msra.mxu0 0.0
        %1591 = vmatprep.subr.mxu0 0.0
        %1592 = vmatpush2.msra.mxu0 0.0
        %1593 = vmatprep.subr.mxu0 0.0
        %1594 = vmatpush2.msra.mxu0 0.0
        %1595 = vmatprep.subr.mxu0 0.0
        %1596 = vmatpush2.msra.mxu0 0.0
        %1597 = vmatprep.subr.mxu0 0.0
        %1598 = vmatpush2.msra.mxu0 0.0
        %1599 = vmatprep.subr.mxu0 0.0
        %1600 = vmatpush2.msra.mxu0 0.0
        %1601 = vmatprep.subr.mxu0 0.0
        %1602 = vmatpush2.msra.mxu0 0.0
        %1603 = vmatprep.mubr.f32.mxu0 0.0
        %1604 = vmatmul.mubr.f32.gmra.mxu0 %v1040
        %v1605 = vpop.f32.mrf.mxu0
        %v1606 = vadd.f32 %v1036, %v1605
        %v1607 = vpop.f32.mrf.mxu0
        %v1608 = vadd.f32 %v1036, %v1607
        %1609 = vdwg.mxu0
        %v1610 = vmax.f32 %v1109, 0.0
        %v1611 = vmax.f32 %v1111, 0.0
        %v1612 = vmax.f32 %v1180, 0.0
        %v1613 = vmax.f32 %v1182, 0.0
        %v1614 = vmax.f32 %v1251, 0.0
        %v1615 = vmax.f32 %v1253, 0.0
        %v1616 = vmax.f32 %v1322, 0.0
        %v1617 = vmax.f32 %v1324, 0.0
        %v1618 = vmax.f32 %v1393, 0.0
        %v1619 = vmax.f32 %v1395, 0.0
        %v1620 = vmax.f32 %v1464, 0.0
        %v1621 = vmax.f32 %v1466, 0.0
        %v1622 = vmax.f32 %v1535, 0.0
        %v1623 = vmax.f32 %v1537, 0.0
        %v1624 = vmax.f32 %v1606, 0.0
        %v1625 = vmax.f32 %v1608, 0.0
        %v1626 = vld [vmem:[%s5] sm:$0x3]
        %v1627 = vld [vmem:[%s6] sm:$0x3]
        %1629 = vset.pattern.permute.xlu0 0
        %1630 = vperm.xlu0 %1629, %v1627
        %v1631 = vpop.permute.xlu0 %1630
        %vm1633 = vcmask 64512
        %v1635 = vsel %vm1633, %v1626, 0
        %1637 = vmatprep.subr.mxu0 0.0
        %1638 = vmatpush1.msra.mxu0 0.0
        %1639 = vmatprep.subr.mxu0 0.0
        %1640 = vmatpush1.msra.mxu0 0.0
        %1641 = vmatprep.subr.mxu0 0.0
        %1642 = vmatpush1.msra.mxu0 0.0
        %1643 = vmatprep.subr.mxu0 0.0
        %1644 = vmatpush1.msra.mxu0 0.0
        %1645 = vmatprep.subr.mxu0 0.0
        %1646 = vmatpush1.msra.mxu0 0.0
        %1647 = vmatprep.subr.mxu0 0.0
        %1648 = vmatpush1.msra.mxu0 0.0
        %1649 = vmatprep.subr.mxu0 0.0
        %1650 = vmatpush1.msra.mxu0 0.0
        %1651 = vmatprep.subr.mxu0 0.0
        %1652 = vmatpush1.msra.mxu0 0.0
        %1653 = vmatprep.subr.mxu0 0.0
        %1654 = vmatpush1.msra.mxu0 0.0
        %1655 = vmatprep.subr.mxu0 0.0
        %1656 = vmatpush1.msra.mxu0 0.0
        %1657 = vmatprep.subr.mxu0 0.0
        %1658 = vmatpush1.msra.mxu0 0.0
        %1659 = vmatprep.subr.mxu0 0.0
        %1660 = vmatpush1.msra.mxu0 0.0
        %1661 = vmatprep.subr.mxu0 0.0
        %1662 = vmatpush1.msra.mxu0 0.0
        %1663 = vmatprep.subr.mxu0 0.0
        %1664 = vmatpush1.msra.mxu0 0.0
        %1665 = vmatprep.subr.mxu0 0.0
        %1666 = vmatpush1.msra.mxu0 0.0
        %1667 = vmatprep.subr.mxu0 %v1611
        %1668 = vmatpush1.msra.mxu0 %v1610
        %1669 = vmatprep.subr.mxu0 0.0
        %1670 = vmatpush2.msra.mxu0 0.0
        %1671 = vmatprep.subr.mxu0 0.0
        %1672 = vmatpush2.msra.mxu0 0.0
        %1673 = vmatprep.subr.mxu0 0.0
        %1674 = vmatpush2.msra.mxu0 0.0
        %1675 = vmatprep.subr.mxu0 0.0
        %1676 = vmatpush2.msra.mxu0 0.0
        %1677 = vmatprep.subr.mxu0 0.0
        %1678 = vmatpush2.msra.mxu0 0.0
        %1679 = vmatprep.subr.mxu0 0.0
        %1680 = vmatpush2.msra.mxu0 0.0
        %1681 = vmatprep.subr.mxu0 0.0
        %1682 = vmatpush2.msra.mxu0 0.0
        %1683 = vmatprep.subr.mxu0 0.0
        %1684 = vmatpush2.msra.mxu0 0.0
        %1685 = vmatprep.subr.mxu0 0.0
        %1686 = vmatpush2.msra.mxu0 0.0
        %1687 = vmatprep.subr.mxu0 0.0
        %1688 = vmatpush2.msra.mxu0 0.0
        %1689 = vmatprep.subr.mxu0 0.0
        %1690 = vmatpush2.msra.mxu0 0.0
        %1691 = vmatprep.subr.mxu0 0.0
        %1692 = vmatpush2.msra.mxu0 0.0
        %1693 = vmatprep.subr.mxu0 0.0
        %1694 = vmatpush2.msra.mxu0 0.0
        %1695 = vmatprep.subr.mxu0 0.0
        %1696 = vmatpush2.msra.mxu0 0.0
        %1697 = vmatprep.subr.mxu0 0.0
        %1698 = vmatpush2.msra.mxu0 0.0
        %1699 = vmatprep.subr.mxu0 0.0
        %1700 = vmatpush2.msra.mxu0 0.0
        %1701 = vmatprep.mubr.f32.mxu0 0.0
        %1702 = vmatmul.mubr.f32.gmra.mxu0 %v1635
        %v1703 = vpop.f32.mrf.mxu0
        %v1704 = vadd.f32 %v1631, %v1703
        %v1705 = vpop.f32.mrf.mxu0
        %v1706 = vadd.f32 %v1631, %v1705
        %1707 = vdwg.mxu0
        %1708 = vmatprep.subr.mxu0 0.0
        %1709 = vmatpush1.msra.mxu0 0.0
        %1710 = vmatprep.subr.mxu0 0.0
        %1711 = vmatpush1.msra.mxu0 0.0
        %1712 = vmatprep.subr.mxu0 0.0
        %1713 = vmatpush1.msra.mxu0 0.0
        %1714 = vmatprep.subr.mxu0 0.0
        %1715 = vmatpush1.msra.mxu0 0.0
        %1716 = vmatprep.subr.mxu0 0.0
        %1717 = vmatpush1.msra.mxu0 0.0
        %1718 = vmatprep.subr.mxu0 0.0
        %1719 = vmatpush1.msra.mxu0 0.0
        %1720 = vmatprep.subr.mxu0 0.0
        %1721 = vmatpush1.msra.mxu0 0.0
        %1722 = vmatprep.subr.mxu0 0.0
        %1723 = vmatpush1.msra.mxu0 0.0
        %1724 = vmatprep.subr.mxu0 0.0
        %1725 = vmatpush1.msra.mxu0 0.0
        %1726 = vmatprep.subr.mxu0 0.0
        %1727 = vmatpush1.msra.mxu0 0.0
        %1728 = vmatprep.subr.mxu0 0.0
        %1729 = vmatpush1.msra.mxu0 0.0
        %1730 = vmatprep.subr.mxu0 0.0
        %1731 = vmatpush1.msra.mxu0 0.0
        %1732 = vmatprep.subr.mxu0 0.0
        %1733 = vmatpush1.msra.mxu0 0.0
        %1734 = vmatprep.subr.mxu0 0.0
        %1735 = vmatpush1.msra.mxu0 0.0
        %1736 = vmatprep.subr.mxu0 0.0
        %1737 = vmatpush1.msra.mxu0 0.0
        %1738 = vmatprep.subr.mxu0 %v1613
        %1739 = vmatpush1.msra.mxu0 %v1612
        %1740 = vmatprep.subr.mxu0 0.0
        %1741 = vmatpush2.msra.mxu0 0.0
        %1742 = vmatprep.subr.mxu0 0.0
        %1743 = vmatpush2.msra.mxu0 0.0
        %1744 = vmatprep.subr.mxu0 0.0
        %1745 = vmatpush2.msra.mxu0 0.0
        %1746 = vmatprep.subr.mxu0 0.0
        %1747 = vmatpush2.msra.mxu0 0.0
        %1748 = vmatprep.subr.mxu0 0.0
        %1749 = vmatpush2.msra.mxu0 0.0
        %1750 = vmatprep.subr.mxu0 0.0
        %1751 = vmatpush2.msra.mxu0 0.0
        %1752 = vmatprep.subr.mxu0 0.0
        %1753 = vmatpush2.msra.mxu0 0.0
        %1754 = vmatprep.subr.mxu0 0.0
        %1755 = vmatpush2.msra.mxu0 0.0
        %1756 = vmatprep.subr.mxu0 0.0
        %1757 = vmatpush2.msra.mxu0 0.0
        %1758 = vmatprep.subr.mxu0 0.0
        %1759 = vmatpush2.msra.mxu0 0.0
        %1760 = vmatprep.subr.mxu0 0.0
        %1761 = vmatpush2.msra.mxu0 0.0
        %1762 = vmatprep.subr.mxu0 0.0
        %1763 = vmatpush2.msra.mxu0 0.0
        %1764 = vmatprep.subr.mxu0 0.0
        %1765 = vmatpush2.msra.mxu0 0.0
        %1766 = vmatprep.subr.mxu0 0.0
        %1767 = vmatpush2.msra.mxu0 0.0
        %1768 = vmatprep.subr.mxu0 0.0
        %1769 = vmatpush2.msra.mxu0 0.0
        %1770 = vmatprep.subr.mxu0 0.0
        %1771 = vmatpush2.msra.mxu0 0.0
        %1772 = vmatprep.mubr.f32.mxu0 0.0
        %1773 = vmatmul.mubr.f32.gmra.mxu0 %v1635
        %v1774 = vpop.f32.mrf.mxu0
        %v1775 = vadd.f32 %v1631, %v1774
        %v1776 = vpop.f32.mrf.mxu0
        %v1777 = vadd.f32 %v1631, %v1776
        %1778 = vdwg.mxu0
        %1779 = vmatprep.subr.mxu0 0.0
        %1780 = vmatpush1.msra.mxu0 0.0
        %1781 = vmatprep.subr.mxu0 0.0
        %1782 = vmatpush1.msra.mxu0 0.0
        %1783 = vmatprep.subr.mxu0 0.0
        %1784 = vmatpush1.msra.mxu0 0.0
        %1785 = vmatprep.subr.mxu0 0.0
        %1786 = vmatpush1.msra.mxu0 0.0
        %1787 = vmatprep.subr.mxu0 0.0
        %1788 = vmatpush1.msra.mxu0 0.0
        %1789 = vmatprep.subr.mxu0 0.0
        %1790 = vmatpush1.msra.mxu0 0.0
        %1791 = vmatprep.subr.mxu0 0.0
        %1792 = vmatpush1.msra.mxu0 0.0
        %1793 = vmatprep.subr.mxu0 0.0
        %1794 = vmatpush1.msra.mxu0 0.0
        %1795 = vmatprep.subr.mxu0 0.0
        %1796 = vmatpush1.msra.mxu0 0.0
        %1797 = vmatprep.subr.mxu0 0.0
        %1798 = vmatpush1.msra.mxu0 0.0
        %1799 = vmatprep.subr.mxu0 0.0
        %1800 = vmatpush1.msra.mxu0 0.0
        %1801 = vmatprep.subr.mxu0 0.0
        %1802 = vmatpush1.msra.mxu0 0.0
        %1803 = vmatprep.subr.mxu0 0.0
        %1804 = vmatpush1.msra.mxu0 0.0
        %1805 = vmatprep.subr.mxu0 0.0
        %1806 = vmatpush1.msra.mxu0 0.0
        %1807 = vmatprep.subr.mxu0 0.0
        %1808 = vmatpush1.msra.mxu0 0.0
        %1809 = vmatprep.subr.mxu0 %v1615
        %1810 = vmatpush1.msra.mxu0 %v1614
        %1811 = vmatprep.subr.mxu0 0.0
        %1812 = vmatpush2.msra.mxu0 0.0
        %1813 = vmatprep.subr.mxu0 0.0
        %1814 = vmatpush2.msra.mxu0 0.0
        %1815 = vmatprep.subr.mxu0 0.0
        %1816 = vmatpush2.msra.mxu0 0.0
        %1817 = vmatprep.subr.mxu0 0.0
        %1818 = vmatpush2.msra.mxu0 0.0
        %1819 = vmatprep.subr.mxu0 0.0
        %1820 = vmatpush2.msra.mxu0 0.0
        %1821 = vmatprep.subr.mxu0 0.0
        %1822 = vmatpush2.msra.mxu0 0.0
        %1823 = vmatprep.subr.mxu0 0.0
        %1824 = vmatpush2.msra.mxu0 0.0
        %1825 = vmatprep.subr.mxu0 0.0
        %1826 = vmatpush2.msra.mxu0 0.0
        %1827 = vmatprep.subr.mxu0 0.0
        %1828 = vmatpush2.msra.mxu0 0.0
        %1829 = vmatprep.subr.mxu0 0.0
        %1830 = vmatpush2.msra.mxu0 0.0
        %1831 = vmatprep.subr.mxu0 0.0
        %1832 = vmatpush2.msra.mxu0 0.0
        %1833 = vmatprep.subr.mxu0 0.0
        %1834 = vmatpush2.msra.mxu0 0.0
        %1835 = vmatprep.subr.mxu0 0.0
        %1836 = vmatpush2.msra.mxu0 0.0
        %1837 = vmatprep.subr.mxu0 0.0
        %1838 = vmatpush2.msra.mxu0 0.0
        %1839 = vmatprep.subr.mxu0 0.0
        %1840 = vmatpush2.msra.mxu0 0.0
        %1841 = vmatprep.subr.mxu0 0.0
        %1842 = vmatpush2.msra.mxu0 0.0
        %1843 = vmatprep.mubr.f32.mxu0 0.0
        %1844 = vmatmul.mubr.f32.gmra.mxu0 %v1635
        %v1845 = vpop.f32.mrf.mxu0
        %v1846 = vadd.f32 %v1631, %v1845
        %v1847 = vpop.f32.mrf.mxu0
        %v1848 = vadd.f32 %v1631, %v1847
        %1849 = vdwg.mxu0
        %1850 = vmatprep.subr.mxu0 0.0
        %1851 = vmatpush1.msra.mxu0 0.0
        %1852 = vmatprep.subr.mxu0 0.0
        %1853 = vmatpush1.msra.mxu0 0.0
        %1854 = vmatprep.subr.mxu0 0.0
        %1855 = vmatpush1.msra.mxu0 0.0
        %1856 = vmatprep.subr.mxu0 0.0
        %1857 = vmatpush1.msra.mxu0 0.0
        %1858 = vmatprep.subr.mxu0 0.0
        %1859 = vmatpush1.msra.mxu0 0.0
        %1860 = vmatprep.subr.mxu0 0.0
        %1861 = vmatpush1.msra.mxu0 0.0
        %1862 = vmatprep.subr.mxu0 0.0
        %1863 = vmatpush1.msra.mxu0 0.0
        %1864 = vmatprep.subr.mxu0 0.0
        %1865 = vmatpush1.msra.mxu0 0.0
        %1866 = vmatprep.subr.mxu0 0.0
        %1867 = vmatpush1.msra.mxu0 0.0
        %1868 = vmatprep.subr.mxu0 0.0
        %1869 = vmatpush1.msra.mxu0 0.0
        %1870 = vmatprep.subr.mxu0 0.0
        %1871 = vmatpush1.msra.mxu0 0.0
        %1872 = vmatprep.subr.mxu0 0.0
        %1873 = vmatpush1.msra.mxu0 0.0
        %1874 = vmatprep.subr.mxu0 0.0
        %1875 = vmatpush1.msra.mxu0 0.0
        %1876 = vmatprep.subr.mxu0 0.0
        %1877 = vmatpush1.msra.mxu0 0.0
        %1878 = vmatprep.subr.mxu0 0.0
        %1879 = vmatpush1.msra.mxu0 0.0
        %1880 = vmatprep.subr.mxu0 %v1617
        %1881 = vmatpush1.msra.mxu0 %v1616
        %1882 = vmatprep.subr.mxu0 0.0
        %1883 = vmatpush2.msra.mxu0 0.0
        %1884 = vmatprep.subr.mxu0 0.0
        %1885 = vmatpush2.msra.mxu0 0.0
        %1886 = vmatprep.subr.mxu0 0.0
        %1887 = vmatpush2.msra.mxu0 0.0
        %1888 = vmatprep.subr.mxu0 0.0
        %1889 = vmatpush2.msra.mxu0 0.0
        %1890 = vmatprep.subr.mxu0 0.0
        %1891 = vmatpush2.msra.mxu0 0.0
        %1892 = vmatprep.subr.mxu0 0.0
        %1893 = vmatpush2.msra.mxu0 0.0
        %1894 = vmatprep.subr.mxu0 0.0
        %1895 = vmatpush2.msra.mxu0 0.0
        %1896 = vmatprep.subr.mxu0 0.0
        %1897 = vmatpush2.msra.mxu0 0.0
        %1898 = vmatprep.subr.mxu0 0.0
        %1899 = vmatpush2.msra.mxu0 0.0
        %1900 = vmatprep.subr.mxu0 0.0
        %1901 = vmatpush2.msra.mxu0 0.0
        %1902 = vmatprep.subr.mxu0 0.0
        %1903 = vmatpush2.msra.mxu0 0.0
        %1904 = vmatprep.subr.mxu0 0.0
        %1905 = vmatpush2.msra.mxu0 0.0
        %1906 = vmatprep.subr.mxu0 0.0
        %1907 = vmatpush2.msra.mxu0 0.0
        %1908 = vmatprep.subr.mxu0 0.0
        %1909 = vmatpush2.msra.mxu0 0.0
        %1910 = vmatprep.subr.mxu0 0.0
        %1911 = vmatpush2.msra.mxu0 0.0
        %1912 = vmatprep.subr.mxu0 0.0
        %1913 = vmatpush2.msra.mxu0 0.0
        %1914 = vmatprep.mubr.f32.mxu0 0.0
        %1915 = vmatmul.mubr.f32.gmra.mxu0 %v1635
        %v1916 = vpop.f32.mrf.mxu0
        %v1917 = vadd.f32 %v1631, %v1916
        %v1918 = vpop.f32.mrf.mxu0
        %v1919 = vadd.f32 %v1631, %v1918
        %1920 = vdwg.mxu0
        %1921 = vmatprep.subr.mxu0 0.0
        %1922 = vmatpush1.msra.mxu0 0.0
        %1923 = vmatprep.subr.mxu0 0.0
        %1924 = vmatpush1.msra.mxu0 0.0
        %1925 = vmatprep.subr.mxu0 0.0
        %1926 = vmatpush1.msra.mxu0 0.0
        %1927 = vmatprep.subr.mxu0 0.0
        %1928 = vmatpush1.msra.mxu0 0.0
        %1929 = vmatprep.subr.mxu0 0.0
        %1930 = vmatpush1.msra.mxu0 0.0
        %1931 = vmatprep.subr.mxu0 0.0
        %1932 = vmatpush1.msra.mxu0 0.0
        %1933 = vmatprep.subr.mxu0 0.0
        %1934 = vmatpush1.msra.mxu0 0.0
        %1935 = vmatprep.subr.mxu0 0.0
        %1936 = vmatpush1.msra.mxu0 0.0
        %1937 = vmatprep.subr.mxu0 0.0
        %1938 = vmatpush1.msra.mxu0 0.0
        %1939 = vmatprep.subr.mxu0 0.0
        %1940 = vmatpush1.msra.mxu0 0.0
        %1941 = vmatprep.subr.mxu0 0.0
        %1942 = vmatpush1.msra.mxu0 0.0
        %1943 = vmatprep.subr.mxu0 0.0
        %1944 = vmatpush1.msra.mxu0 0.0
        %1945 = vmatprep.subr.mxu0 0.0
        %1946 = vmatpush1.msra.mxu0 0.0
        %1947 = vmatprep.subr.mxu0 0.0
        %1948 = vmatpush1.msra.mxu0 0.0
        %1949 = vmatprep.subr.mxu0 0.0
        %1950 = vmatpush1.msra.mxu0 0.0
        %1951 = vmatprep.subr.mxu0 %v1619
        %1952 = vmatpush1.msra.mxu0 %v1618
        %1953 = vmatprep.subr.mxu0 0.0
        %1954 = vmatpush2.msra.mxu0 0.0
        %1955 = vmatprep.subr.mxu0 0.0
        %1956 = vmatpush2.msra.mxu0 0.0
        %1957 = vmatprep.subr.mxu0 0.0
        %1958 = vmatpush2.msra.mxu0 0.0
        %1959 = vmatprep.subr.mxu0 0.0
        %1960 = vmatpush2.msra.mxu0 0.0
        %1961 = vmatprep.subr.mxu0 0.0
        %1962 = vmatpush2.msra.mxu0 0.0
        %1963 = vmatprep.subr.mxu0 0.0
        %1964 = vmatpush2.msra.mxu0 0.0
        %1965 = vmatprep.subr.mxu0 0.0
        %1966 = vmatpush2.msra.mxu0 0.0
        %1967 = vmatprep.subr.mxu0 0.0
        %1968 = vmatpush2.msra.mxu0 0.0
        %1969 = vmatprep.subr.mxu0 0.0
        %1970 = vmatpush2.msra.mxu0 0.0
        %1971 = vmatprep.subr.mxu0 0.0
        %1972 = vmatpush2.msra.mxu0 0.0
        %1973 = vmatprep.subr.mxu0 0.0
        %1974 = vmatpush2.msra.mxu0 0.0
        %1975 = vmatprep.subr.mxu0 0.0
        %1976 = vmatpush2.msra.mxu0 0.0
        %1977 = vmatprep.subr.mxu0 0.0
        %1978 = vmatpush2.msra.mxu0 0.0
        %1979 = vmatprep.subr.mxu0 0.0
        %1980 = vmatpush2.msra.mxu0 0.0
        %1981 = vmatprep.subr.mxu0 0.0
        %1982 = vmatpush2.msra.mxu0 0.0
        %1983 = vmatprep.subr.mxu0 0.0
        %1984 = vmatpush2.msra.mxu0 0.0
        %1985 = vmatprep.mubr.f32.mxu0 0.0
        %1986 = vmatmul.mubr.f32.gmra.mxu0 %v1635
        %v1987 = vpop.f32.mrf.mxu0
        %v1988 = vadd.f32 %v1631, %v1987
        %v1989 = vpop.f32.mrf.mxu0
        %v1990 = vadd.f32 %v1631, %v1989
        %1991 = vdwg.mxu0
        %1992 = vmatprep.subr.mxu0 0.0
        %1993 = vmatpush1.msra.mxu0 0.0
        %1994 = vmatprep.subr.mxu0 0.0
        %1995 = vmatpush1.msra.mxu0 0.0
        %1996 = vmatprep.subr.mxu0 0.0
        %1997 = vmatpush1.msra.mxu0 0.0
        %1998 = vmatprep.subr.mxu0 0.0
        %1999 = vmatpush1.msra.mxu0 0.0
        %2000 = vmatprep.subr.mxu0 0.0
        %2001 = vmatpush1.msra.mxu0 0.0
        %2002 = vmatprep.subr.mxu0 0.0
        %2003 = vmatpush1.msra.mxu0 0.0
        %2004 = vmatprep.subr.mxu0 0.0
        %2005 = vmatpush1.msra.mxu0 0.0
        %2006 = vmatprep.subr.mxu0 0.0
        %2007 = vmatpush1.msra.mxu0 0.0
        %2008 = vmatprep.subr.mxu0 0.0
        %2009 = vmatpush1.msra.mxu0 0.0
        %2010 = vmatprep.subr.mxu0 0.0
        %2011 = vmatpush1.msra.mxu0 0.0
        %2012 = vmatprep.subr.mxu0 0.0
        %2013 = vmatpush1.msra.mxu0 0.0
        %2014 = vmatprep.subr.mxu0 0.0
        %2015 = vmatpush1.msra.mxu0 0.0
        %2016 = vmatprep.subr.mxu0 0.0
        %2017 = vmatpush1.msra.mxu0 0.0
        %2018 = vmatprep.subr.mxu0 0.0
        %2019 = vmatpush1.msra.mxu0 0.0
        %2020 = vmatprep.subr.mxu0 0.0
        %2021 = vmatpush1.msra.mxu0 0.0
        %2022 = vmatprep.subr.mxu0 %v1621
        %2023 = vmatpush1.msra.mxu0 %v1620
        %2024 = vmatprep.subr.mxu0 0.0
        %2025 = vmatpush2.msra.mxu0 0.0
        %2026 = vmatprep.subr.mxu0 0.0
        %2027 = vmatpush2.msra.mxu0 0.0
        %2028 = vmatprep.subr.mxu0 0.0
        %2029 = vmatpush2.msra.mxu0 0.0
        %2030 = vmatprep.subr.mxu0 0.0
        %2031 = vmatpush2.msra.mxu0 0.0
        %2032 = vmatprep.subr.mxu0 0.0
        %2033 = vmatpush2.msra.mxu0 0.0
        %2034 = vmatprep.subr.mxu0 0.0
        %2035 = vmatpush2.msra.mxu0 0.0
        %2036 = vmatprep.subr.mxu0 0.0
        %2037 = vmatpush2.msra.mxu0 0.0
        %2038 = vmatprep.subr.mxu0 0.0
        %2039 = vmatpush2.msra.mxu0 0.0
        %2040 = vmatprep.subr.mxu0 0.0
        %2041 = vmatpush2.msra.mxu0 0.0
        %2042 = vmatprep.subr.mxu0 0.0
        %2043 = vmatpush2.msra.mxu0 0.0
        %2044 = vmatprep.subr.mxu0 0.0
        %2045 = vmatpush2.msra.mxu0 0.0
        %2046 = vmatprep.subr.mxu0 0.0
        %2047 = vmatpush2.msra.mxu0 0.0
        %2048 = vmatprep.subr.mxu0 0.0
        %2049 = vmatpush2.msra.mxu0 0.0
        %2050 = vmatprep.subr.mxu0 0.0
        %2051 = vmatpush2.msra.mxu0 0.0
        %2052 = vmatprep.subr.mxu0 0.0
        %2053 = vmatpush2.msra.mxu0 0.0
        %2054 = vmatprep.subr.mxu0 0.0
        %2055 = vmatpush2.msra.mxu0 0.0
        %2056 = vmatprep.mubr.f32.mxu0 0.0
        %2057 = vmatmul.mubr.f32.gmra.mxu0 %v1635
        %v2058 = vpop.f32.mrf.mxu0
        %v2059 = vadd.f32 %v1631, %v2058
        %v2060 = vpop.f32.mrf.mxu0
        %v2061 = vadd.f32 %v1631, %v2060
        %2062 = vdwg.mxu0
        %2063 = vmatprep.subr.mxu0 0.0
        %2064 = vmatpush1.msra.mxu0 0.0
        %2065 = vmatprep.subr.mxu0 0.0
        %2066 = vmatpush1.msra.mxu0 0.0
        %2067 = vmatprep.subr.mxu0 0.0
        %2068 = vmatpush1.msra.mxu0 0.0
        %2069 = vmatprep.subr.mxu0 0.0
        %2070 = vmatpush1.msra.mxu0 0.0
        %2071 = vmatprep.subr.mxu0 0.0
        %2072 = vmatpush1.msra.mxu0 0.0
        %2073 = vmatprep.subr.mxu0 0.0
        %2074 = vmatpush1.msra.mxu0 0.0
        %2075 = vmatprep.subr.mxu0 0.0
        %2076 = vmatpush1.msra.mxu0 0.0
        %2077 = vmatprep.subr.mxu0 0.0
        %2078 = vmatpush1.msra.mxu0 0.0
        %2079 = vmatprep.subr.mxu0 0.0
        %2080 = vmatpush1.msra.mxu0 0.0
        %2081 = vmatprep.subr.mxu0 0.0
        %2082 = vmatpush1.msra.mxu0 0.0
        %2083 = vmatprep.subr.mxu0 0.0
        %2084 = vmatpush1.msra.mxu0 0.0
        %2085 = vmatprep.subr.mxu0 0.0
        %2086 = vmatpush1.msra.mxu0 0.0
        %2087 = vmatprep.subr.mxu0 0.0
        %2088 = vmatpush1.msra.mxu0 0.0
        %2089 = vmatprep.subr.mxu0 0.0
        %2090 = vmatpush1.msra.mxu0 0.0
        %2091 = vmatprep.subr.mxu0 0.0
        %2092 = vmatpush1.msra.mxu0 0.0
        %2093 = vmatprep.subr.mxu0 %v1623
        %2094 = vmatpush1.msra.mxu0 %v1622
        %2095 = vmatprep.subr.mxu0 0.0
        %2096 = vmatpush2.msra.mxu0 0.0
        %2097 = vmatprep.subr.mxu0 0.0
        %2098 = vmatpush2.msra.mxu0 0.0
        %2099 = vmatprep.subr.mxu0 0.0
        %2100 = vmatpush2.msra.mxu0 0.0
        %2101 = vmatprep.subr.mxu0 0.0
        %2102 = vmatpush2.msra.mxu0 0.0
        %2103 = vmatprep.subr.mxu0 0.0
        %2104 = vmatpush2.msra.mxu0 0.0
        %2105 = vmatprep.subr.mxu0 0.0
        %2106 = vmatpush2.msra.mxu0 0.0
        %2107 = vmatprep.subr.mxu0 0.0
        %2108 = vmatpush2.msra.mxu0 0.0
        %2109 = vmatprep.subr.mxu0 0.0
        %2110 = vmatpush2.msra.mxu0 0.0
        %2111 = vmatprep.subr.mxu0 0.0
        %2112 = vmatpush2.msra.mxu0 0.0
        %2113 = vmatprep.subr.mxu0 0.0
        %2114 = vmatpush2.msra.mxu0 0.0
        %2115 = vmatprep.subr.mxu0 0.0
        %2116 = vmatpush2.msra.mxu0 0.0
        %2117 = vmatprep.subr.mxu0 0.0
        %2118 = vmatpush2.msra.mxu0 0.0
        %2119 = vmatprep.subr.mxu0 0.0
        %2120 = vmatpush2.msra.mxu0 0.0
        %2121 = vmatprep.subr.mxu0 0.0
        %2122 = vmatpush2.msra.mxu0 0.0
        %2123 = vmatprep.subr.mxu0 0.0
        %2124 = vmatpush2.msra.mxu0 0.0
        %2125 = vmatprep.subr.mxu0 0.0
        %2126 = vmatpush2.msra.mxu0 0.0
        %2127 = vmatprep.mubr.f32.mxu0 0.0
        %2128 = vmatmul.mubr.f32.gmra.mxu0 %v1635
        %v2129 = vpop.f32.mrf.mxu0
        %v2130 = vadd.f32 %v1631, %v2129
        %v2131 = vpop.f32.mrf.mxu0
        %v2132 = vadd.f32 %v1631, %v2131
        %2133 = vdwg.mxu0
        %2134 = vmatprep.subr.mxu0 0.0
        %2135 = vmatpush1.msra.mxu0 0.0
        %2136 = vmatprep.subr.mxu0 0.0
        %2137 = vmatpush1.msra.mxu0 0.0
        %2138 = vmatprep.subr.mxu0 0.0
        %2139 = vmatpush1.msra.mxu0 0.0
        %2140 = vmatprep.subr.mxu0 0.0
        %2141 = vmatpush1.msra.mxu0 0.0
        %2142 = vmatprep.subr.mxu0 0.0
        %2143 = vmatpush1.msra.mxu0 0.0
        %2144 = vmatprep.subr.mxu0 0.0
        %2145 = vmatpush1.msra.mxu0 0.0
        %2146 = vmatprep.subr.mxu0 0.0
        %2147 = vmatpush1.msra.mxu0 0.0
        %2148 = vmatprep.subr.mxu0 0.0
        %2149 = vmatpush1.msra.mxu0 0.0
        %2150 = vmatprep.subr.mxu0 0.0
        %2151 = vmatpush1.msra.mxu0 0.0
        %2152 = vmatprep.subr.mxu0 0.0
        %2153 = vmatpush1.msra.mxu0 0.0
        %2154 = vmatprep.subr.mxu0 0.0
        %2155 = vmatpush1.msra.mxu0 0.0
        %2156 = vmatprep.subr.mxu0 0.0
        %2157 = vmatpush1.msra.mxu0 0.0
        %2158 = vmatprep.subr.mxu0 0.0
        %2159 = vmatpush1.msra.mxu0 0.0
        %2160 = vmatprep.subr.mxu0 0.0
        %2161 = vmatpush1.msra.mxu0 0.0
        %2162 = vmatprep.subr.mxu0 0.0
        %2163 = vmatpush1.msra.mxu0 0.0
        %2164 = vmatprep.subr.mxu0 %v1625
        %2165 = vmatpush1.msra.mxu0 %v1624
        %2166 = vmatprep.subr.mxu0 0.0
        %2167 = vmatpush2.msra.mxu0 0.0
        %2168 = vmatprep.subr.mxu0 0.0
        %2169 = vmatpush2.msra.mxu0 0.0
        %2170 = vmatprep.subr.mxu0 0.0
        %2171 = vmatpush2.msra.mxu0 0.0
        %2172 = vmatprep.subr.mxu0 0.0
        %2173 = vmatpush2.msra.mxu0 0.0
        %2174 = vmatprep.subr.mxu0 0.0
        %2175 = vmatpush2.msra.mxu0 0.0
        %2176 = vmatprep.subr.mxu0 0.0
        %2177 = vmatpush2.msra.mxu0 0.0
        %2178 = vmatprep.subr.mxu0 0.0
        %2179 = vmatpush2.msra.mxu0 0.0
        %2180 = vmatprep.subr.mxu0 0.0
        %2181 = vmatpush2.msra.mxu0 0.0
        %2182 = vmatprep.subr.mxu0 0.0
        %2183 = vmatpush2.msra.mxu0 0.0
        %2184 = vmatprep.subr.mxu0 0.0
        %2185 = vmatpush2.msra.mxu0 0.0
        %2186 = vmatprep.subr.mxu0 0.0
        %2187 = vmatpush2.msra.mxu0 0.0
        %2188 = vmatprep.subr.mxu0 0.0
        %2189 = vmatpush2.msra.mxu0 0.0
        %2190 = vmatprep.subr.mxu0 0.0
        %2191 = vmatpush2.msra.mxu0 0.0
        %2192 = vmatprep.subr.mxu0 0.0
        %2193 = vmatpush2.msra.mxu0 0.0
        %2194 = vmatprep.subr.mxu0 0.0
        %2195 = vmatpush2.msra.mxu0 0.0
        %2196 = vmatprep.subr.mxu0 0.0
        %2197 = vmatpush2.msra.mxu0 0.0
        %2198 = vmatprep.mubr.f32.mxu0 0.0
        %2199 = vmatmul.mubr.f32.gmra.mxu0 %v1635
        %v2200 = vpop.f32.mrf.mxu0
        %v2201 = vadd.f32 %v1631, %v2200
        %v2202 = vpop.f32.mrf.mxu0
        %v2203 = vadd.f32 %v1631, %v2202
        %2204 = vdwg.mxu0
        %v2221 = vcombine.low %v1704, %v1706
        %v2222 = vcombine.low %v1775, %v1777
        %v2224 = vunpack.c.l.s4 1983009808
        %v2225 = vunpack.c.0.s8 %v2224
        %v2226 = vlaneseq
        %v2227 = vshrl.u32 %v2226, 7
        %v2228 = vsub.s32 %v2225, %v2227
        %v2229 = vrot.slane %v2221, %v2228
        %v2231 = vunpack.c.l.s4 1983009808
        %v2232 = vunpack.c.0.s8 %v2231
        %v2233 = vlaneseq
        %v2234 = vshrl.u32 %v2233, 7
        %v2235 = vsub.s32 %v2232, %v2234
        %v2236 = vrot.slane %v2222, %v2235
        %v2237 = vcombine.low %v2229, %v2236
        %v2238 = vcombine.low %v1846, %v1848
        %v2239 = vcombine.low %v1917, %v1919
        %v2241 = vunpack.c.l.s4 1983009808
        %v2242 = vunpack.c.0.s8 %v2241
        %v2243 = vlaneseq
        %v2244 = vshrl.u32 %v2243, 7
        %v2245 = vsub.s32 %v2242, %v2244
        %v2246 = vrot.slane %v2238, %v2245
        %v2248 = vunpack.c.l.s4 1983009808
        %v2249 = vunpack.c.0.s8 %v2248
        %v2250 = vlaneseq
        %v2251 = vshrl.u32 %v2250, 7
        %v2252 = vsub.s32 %v2249, %v2251
        %v2253 = vrot.slane %v2239, %v2252
        %v2254 = vcombine.low %v2246, %v2253
        %v2255 = vcombine.low %v1988, %v1990
        %v2256 = vcombine.low %v2059, %v2061
        %v2258 = vunpack.c.l.s4 1983009808
        %v2259 = vunpack.c.0.s8 %v2258
        %v2260 = vlaneseq
        %v2261 = vshrl.u32 %v2260, 7
        %v2262 = vsub.s32 %v2259, %v2261
        %v2263 = vrot.slane %v2255, %v2262
        %v2265 = vunpack.c.l.s4 1983009808
        %v2266 = vunpack.c.0.s8 %v2265
        %v2267 = vlaneseq
        %v2268 = vshrl.u32 %v2267, 7
        %v2269 = vsub.s32 %v2266, %v2268
        %v2270 = vrot.slane %v2256, %v2269
        %v2271 = vcombine.low %v2263, %v2270
        %v2272 = vcombine.low %v2130, %v2132
        %v2273 = vcombine.low %v2201, %v2203
        %v2275 = vunpack.c.l.s4 1983009808
        %v2276 = vunpack.c.0.s8 %v2275
        %v2277 = vlaneseq
        %v2278 = vshrl.u32 %v2277, 7
        %v2279 = vsub.s32 %v2276, %v2278
        %v2280 = vrot.slane %v2272, %v2279
        %v2282 = vunpack.c.l.s4 1983009808
        %v2283 = vunpack.c.0.s8 %v2282
        %v2284 = vlaneseq
        %v2285 = vshrl.u32 %v2284, 7
        %v2286 = vsub.s32 %v2283, %v2285
        %v2287 = vrot.slane %v2273, %v2286
        %v2288 = vcombine.low %v2280, %v2287
        %2293 = vst [vmem:[%s294] sm:$0xff] %v2237
        %2294 = vst [vmem:[%s294 + $0x8] sm:$0xff] %v2254
        %2295 = vst [vmem:[%s294 + $0x10] sm:$0xff] %v2271
        %2296 = vst [vmem:[%s294 + $0x18] sm:$0xff] %v2288
        %s2297 = sand.u32 %s184, 1
        %s2298 = scalar_lea.sflag [#allocation4], %s2297
        %s2299 = sand.u32 %s184, 1
        %s2300 = smul.addr %s2299, 32
        %s2301 = scalar_lea.vmem [#allocation5], %s2300
        // Predicated region
        $region53: #{tpu_custom_call.1} parent=47 // pred_check
          %p2302 = pneg %p194
        $region54: #{tpu_custom_call.1} parent=47 // pred_check_branch
          %2304 = sbr.rel (%p2302) target = $region56
        $region55: #{tpu_custom_call.1} parent=47 // pred_region
          %s2305 = smul.u32 16, %s24
          %s2307 = ssub.s32 512, 512
          %2308 = vsyncadd %s2298, %s2307
          %s2309 = smul.addr %s2305, 32
          %s2310 = scalar_lea.hbm %s7, %s2309
          %s2312 = sshll.u32 %s2301, 4
          %s2313 = int_to_ptr.vmem [resolvable:$true] %s2312
          %2315 = dma.vmem_to_hbm [thread:$0]  %s2313, 512, %s2310, %s2298
        $region56: #{tpu_custom_call.1} parent=47 // pred_fallthru
          _
      $region48: #{tpu_custom_call.1} parent=5 // pred_fallthru
        _
      %p2316 = scmp.le.s32.totalorder 2, %s19
      // Predicated region
      $region57: #{tpu_custom_call.1} parent=5 // pred_check
        %p2317 = pneg %p2316
      $region58: #{tpu_custom_call.1} parent=5 // pred_check_branch
        %2319 = sbr.rel (%p2317) target = $region60
      $region59: #{tpu_custom_call.1} parent=5 // pred_region
        %s2320 = ssub.s32 %s19, 2
        // Predicated region
        $region61: #{tpu_custom_call.1} parent=59 // pred_check
          %p2321 = pneg %p200
        $region62: #{tpu_custom_call.1} parent=59 // pred_check_branch
          %2323 = sbr.rel (%p2321) target = $region64
        $region63: #{tpu_custom_call.1} parent=59 // pred_region
          %s2324 = sand.u32 %s185, 1
          %s2325 = scalar_lea.sflag [#allocation4], %s2324
          %s2326 = sand.u32 %s185, 1
          %s2327 = smul.addr %s2326, 32
          %s2328 = scalar_lea.vmem [#allocation5], %s2327
          %2329 = dma.done %s2325, 512
        $region64: #{tpu_custom_call.1} parent=59 // pred_fallthru
          _
      $region60: #{tpu_custom_call.1} parent=5 // pred_fallthru
        _
    $region6: #{tpu_custom_call.1} parent=1 // loop_footer
      %s23 = sadd.s32 1, %s19
    $region7: #{tpu_custom_call.1} parent=1 // loop_footer_branch
      %18 = sbr.rel target = $region3
    $region8: #{tpu_custom_call.1} parent=1 // loop_exit
      _
    %2330 = vsyncpa [#allocation3], 1
    %s2331 = scalar_lea.sflag [#allocation3], 1
    %2332 = vsyncpa %s2331, 1
    %2333 = vsyncpa [#allocation4], 1
    %s2334 = scalar_lea.sflag [#allocation4], 1
    %2335 = vsyncpa %s2334, 1

</llo_original>
